<compile_context>
chip_gen: v5e
topology: v5e:2x2
jax: 0.10.0
libtpu: 0.0.40
codegen_flags: <defaults>
</compile_context>

<pallas_src>
import jax
import jax.numpy as jnp
from jax.experimental import pallas as pl
from jax.experimental.pallas import tpu as pltpu

# ----------------------------- config (small) -------------------------------
B = 2          # batch_size
L = 8          # max_length == sequence / preferences / rejected length
D = 32         # dim == embedding_size
H = 2          # attention heads (D % H == 0)
DH = D // H
FF = 4 * D     # FFN hidden size
NL = 2         # num_layers (fixed to 2 in Model_gen.__init__)
E = 3          # number of encoders: SAS, prefer, neg
EB = E * B     # fused encoder-batch axis
VOCAB = 64     # vocab_size
USERS = 16     # user_size
EPS = 1e-12
NEG_INF = -1e8

_VMEM = pl.BlockSpec(memory_space=pltpu.MemorySpace.VMEM)
_SMEM = pl.BlockSpec(memory_space=pltpu.MemorySpace.SMEM)


def _layer_norm(x, g, b):
    mu = jnp.mean(x, axis=-1, keepdims=True)
    var = jnp.mean((x - mu) ** 2, axis=-1, keepdims=True)
    return (x - mu) * jax.lax.rsqrt(var + EPS) * g + b


# ------------------------- single fused forward kernel -----------------------
def fused_kernel(ids_ref, vids_ref, table_ref, pos_ref, lng_ref, lnb_ref,
                 wq_ref, bq_ref, wk_ref, bk_ref, wv_ref, bv_ref,
                 wo_ref, bo_ref, ln1g_ref, ln1b_ref,
                 w1_ref, b1_ref, w2_ref, b2_ref, ln2g_ref, ln2b_ref,
                 wn_ref, bn_ref, loss_ref):
    table = table_ref[...]                                      # [VOCAB, D]

    # ---- in-kernel embedding gather: exact one-hot matmul on the MXU ----
    ids = ids_ref[...]                                          # [EB, L] int32
    iota_v = jax.lax.broadcasted_iota(jnp.int32, (EB, L, VOCAB), 2)
    onehot = (ids[:, :, None] == iota_v).astype(jnp.float32)    # [EB, L, V]
    seq_emb = jnp.dot(onehot.reshape(EB * L, VOCAB), table,
                      preferred_element_type=jnp.float32)
    seq_emb = seq_emb.reshape(EB, L, D)                         # [EB, L, D]

    vids = vids_ref[...]                                        # [2, B] (pos, neg)
    iota_i = jax.lax.broadcasted_iota(jnp.int32, (2, B, VOCAB), 2)
    onehot_i = (vids[:, :, None] == iota_i).astype(jnp.float32)
    item_vec = jnp.dot(onehot_i.reshape(2 * B, VOCAB), table,
                       preferred_element_type=jnp.float32)      # [2B, D]

    # ---- additive padding mask, built in-kernel from the ids ----
    mask = (ids == 0).astype(jnp.float32) * NEG_INF             # [EB, L]

    # ---- positional add + LayerNorm (main sequence = encoder-0 rows only) ----
    x_ln = _layer_norm(seq_emb + pos_ref[...][None, :, :], lng_ref[0], lnb_ref[0])
    row = jax.lax.broadcasted_iota(jnp.int32, (EB, 1, 1), 0)
    x = jnp.where(row < B, x_ln, seq_emb)                       # [EB, L, D]

    # ---- stacked encoder weights (already row-repeated per batch element) ----
    wq, bq = wq_ref[...], bq_ref[...]
    wk, bk = wk_ref[...], bk_ref[...]
    wv, bv = wv_ref[...], bv_ref[...]
    wo, bo = wo_ref[...], bo_ref[...]
    ln1g, ln1b = ln1g_ref[...], ln1b_ref[...]
    w1, b1 = w1_ref[...], b1_ref[...]
    w2, b2 = w2_ref[...], b2_ref[...]
    ln2g, ln2b = ln2g_ref[...], ln2b_ref[...]

    scale = 1.0 / (DH ** 0.5)
    for l in range(NL):                                         # static unroll (2)
        # ---- batched multi-head self-attention over all 3 encoders at once ----
        q = jnp.einsum('bsd,bde->bse', x, wq[:, l],
                       preferred_element_type=jnp.float32) + bq[:, l][:, None, :]
        k = jnp.einsum('bsd,bde->bse', x, wk[:, l],
                       preferred_element_type=jnp.float32) + bk[:, l][:, None, :]
        v = jnp.einsum('bsd,bde->bse', x, wv[:, l],
                       preferred_element_type=jnp.float32) + bv[:, l][:, None, :]

        ctx_heads = []
        for h in range(H):                                      # static unroll (2)
            sl = slice(h * DH, (h + 1) * DH)
            qh, kh, vh = q[:, :, sl], k[:, :, sl], v[:, :, sl]
            s = jnp.einsum('bqd,bkd->bqk', qh, kh,
                           preferred_element_type=jnp.float32) * scale
            s = s + mask[:, None, :]
            s = s - jnp.max(s, axis=-1, keepdims=True)
            p = jnp.exp(s)
            p = p * pl.reciprocal(jnp.sum(p, axis=-1, keepdims=True), approx=True)
            ctx_heads.append(jnp.einsum('bqk,bkd->bqd', p, vh,
                                        preferred_element_type=jnp.float32))
        ctx = jnp.concatenate(ctx_heads, axis=-1)               # [EB, L, D]

        attn_out = jnp.einsum('bsd,bde->bse', ctx, wo[:, l],
                              preferred_element_type=jnp.float32) + bo[:, l][:, None, :]
        x = _layer_norm(attn_out + x,
                        ln1g[:, l][:, None, :], ln1b[:, l][:, None, :])

        # ---- feed-forward ----
        hid = jnp.einsum('bsd,bdf->bsf', x, w1[:, l],
                         preferred_element_type=jnp.float32) + b1[:, l][:, None, :]
        hid = jax.nn.gelu(hid)          # TODO(synk): tanh-approx GELU (Encoder def not in spec)
        ffn = jnp.einsum('bsf,bfd->bsd', hid, w2[:, l],
                         preferred_element_type=jnp.float32) + b2[:, l][:, None, :]
        x = _layer_norm(ffn + x,
                        ln2g[:, l][:, None, :], ln2b[:, l][:, None, :])

    # ---- item_match head + BCE(sigmoid(pos_score - neg_score), ones) ----
    user_emb = x[0:B, L - 1, :]                                 # last token, encoder 0
    t = jnp.dot(user_emb, wn_ref[...],
                preferred_element_type=jnp.float32) + bn_ref[0]
    pos_score = jax.nn.sigmoid(t * item_vec[0:B])               # item_match(pos)
    neg_score = jax.nn.sigmoid(t * item_vec[B:2 * B])           # item_match(neg)
    diff = pos_score - neg_score
    # BCE(sigmoid(diff), 1) == -mean(log(sigmoid(diff))) == mean(log(1 + exp(-diff)))
    loss_ref[0, 0] = jnp.mean(jnp.log(1.0 + jnp.exp(-diff)))


# ------------------------------ parameters -----------------------------------
def make_encoder_params(key):
    """Weights for all E=3 encoders stacked along a leading axis."""
    ks = jax.random.split(key, 6)
    wq = 0.02 * jax.random.normal(ks[0], (E, NL, D, D), jnp.float32)
    wk = 0.02 * jax.random.normal(ks[1], (E, NL, D, D), jnp.float32)
    wv = 0.02 * jax.random.normal(ks[2], (E, NL, D, D), jnp.float32)
    wo = 0.02 * jax.random.normal(ks[3], (E, NL, D, D), jnp.float32)
    w1 = 0.02 * jax.random.normal(ks[4], (E, NL, D, FF), jnp.float32)
    w2 = 0.02 * jax.random.normal(ks[5], (E, NL, FF, D), jnp.float32)
    zD = jnp.zeros((E, NL, D), jnp.float32)
    zF = jnp.zeros((E, NL, FF), jnp.float32)
    oD = jnp.ones((E, NL, D), jnp.float32)
    # order must match fused_kernel signature
    return (wq, zD, wk, zD, wv, zD, wo, zD, oD, zD, w1, zF, w2, zD, oD, zD)


def make_params(key):
    ks = jax.random.split(key, 6)
    std = D ** (-0.5)
    return {
        'item_emb': std * jax.random.normal(ks[0], (VOCAB, D), jnp.float32),
        'user_emb': std * jax.random.normal(ks[1], (USERS, D), jnp.float32),
        'pos_emb': jax.random.normal(ks[2], (L, D), jnp.float32),
        'ln_g': jnp.ones((1, D), jnp.float32),
        'ln_b': jnp.zeros((1, D), jnp.float32),
        'enc': make_encoder_params(ks[3]),          # [SAS, prefer, neg] stacked
        'item_norm_w': 0.1 * jax.random.normal(ks[4], (D, D), jnp.float32),
        'item_norm_b': 0.1 * jax.random.normal(ks[5], (1, D), jnp.float32),
    }


# ------------------------------- forward --------------------------------------
@jax.jit
def model_gen_forward(params, user, sequence, preferences, rejected,
                      pos_item, neg_item):
    # user_embeddings(user) is computed in the reference forward but unused by
    # the returned loss (item_match ignores it) -> intentionally not materialized.
    del user

    # stack the three token sequences -> one fused encoder-batch axis [EB, L]
    ids = jnp.stack([sequence, preferences, rejected], axis=0).astype(jnp.int32)
    ids = ids.reshape(EB, L)
    vids = jnp.stack([pos_item, neg_item], axis=0).astype(jnp.int32)   # [2, B]

    # repeat each encoder's weights B times so row e*B+b uses encoder e's weights
    enc = tuple(jnp.repeat(t, B, axis=0) for t in params['enc'])       # [EB, NL, ...]

    loss = pl.pallas_call(
        fused_kernel,
        out_shape=jax.ShapeDtypeStruct((1, 1), jnp.float32),
        in_specs=[_VMEM] * 24,
        out_specs=_SMEM,
    )(ids, vids, params['item_emb'], params['pos_emb'],
      params['ln_g'], params['ln_b'], *enc,
      params['item_norm_w'], params['item_norm_b'])
    return loss[0, 0]


# --------------------------------- main ---------------------------------------
if __name__ == "__main__":
    ikey = jax.random.PRNGKey(0)
    k1, k2, k3, k4, k5, k6 = jax.random.split(ikey, 6)

    sequence = jax.random.randint(k1, (B, L), 0, VOCAB, dtype=jnp.int32)
    preferences = jax.random.randint(k2, (B, L), 0, VOCAB, dtype=jnp.int32)
    rejected = jax.random.randint(k3, (B, L), 0, VOCAB, dtype=jnp.int32)
    user = jax.random.randint(k4, (B,), 0, USERS, dtype=jnp.int32)
    pos_item = jax.random.randint(k5, (B,), 1, VOCAB, dtype=jnp.int32)
    neg_item = jax.random.randint(k6, (B,), 1, VOCAB, dtype=jnp.int32)

    params = make_params(jax.random.PRNGKey(1))

    v_loss = model_gen_forward(params, user, sequence, preferences, rejected,
                               pos_item, neg_item)
    v_loss = jax.block_until_ready(v_loss)
    assert v_loss.shape == () and bool(jnp.isfinite(v_loss))
    print("KERNEL_OK")
</pallas_src>

<mosaic_0001>
module attributes {stable_mosaic.version = 11 : i64} {
  func.func @fused_kernel(%arg0: memref<6x8xi32, #tpu.memory_space<vmem>>, %arg1: memref<2x2xi32, #tpu.memory_space<vmem>>, %arg2: memref<64x32xf32, #tpu.memory_space<vmem>>, %arg3: memref<8x32xf32, #tpu.memory_space<vmem>>, %arg4: memref<1x32xf32, #tpu.memory_space<vmem>>, %arg5: memref<1x32xf32, #tpu.memory_space<vmem>>, %arg6: memref<6x2x32x32xf32, #tpu.memory_space<vmem>>, %arg7: memref<6x2x32xf32, #tpu.memory_space<vmem>>, %arg8: memref<6x2x32x32xf32, #tpu.memory_space<vmem>>, %arg9: memref<6x2x32xf32, #tpu.memory_space<vmem>>, %arg10: memref<6x2x32x32xf32, #tpu.memory_space<vmem>>, %arg11: memref<6x2x32xf32, #tpu.memory_space<vmem>>, %arg12: memref<6x2x32x32xf32, #tpu.memory_space<vmem>>, %arg13: memref<6x2x32xf32, #tpu.memory_space<vmem>>, %arg14: memref<6x2x32xf32, #tpu.memory_space<vmem>>, %arg15: memref<6x2x32xf32, #tpu.memory_space<vmem>>, %arg16: memref<6x2x32x128xf32, #tpu.memory_space<vmem>>, %arg17: memref<6x2x128xf32, #tpu.memory_space<vmem>>, %arg18: memref<6x2x128x32xf32, #tpu.memory_space<vmem>>, %arg19: memref<6x2x32xf32, #tpu.memory_space<vmem>>, %arg20: memref<6x2x32xf32, #tpu.memory_space<vmem>>, %arg21: memref<6x2x32xf32, #tpu.memory_space<vmem>>, %arg22: memref<32x32xf32, #tpu.memory_space<vmem>>, %arg23: memref<1x32xf32, #tpu.memory_space<vmem>>, %arg24: memref<1x1xf32, #tpu.memory_space<smem>>) attributes {dimension_semantics = [], scalar_prefetch = 0 : i64, scratch_operands = 0 : i64, tpu.core_type = #tpu.core_type<tc>} {
    %c0 = arith.constant 0 : index
    %c0_0 = arith.constant 0 : index
    %0 = vector.load %arg2[%c0, %c0_0] : memref<64x32xf32, #tpu.memory_space<vmem>>, vector<64x32xf32>
    %c0_1 = arith.constant 0 : index
    %c0_2 = arith.constant 0 : index
    %1 = vector.load %arg0[%c0_1, %c0_2] : memref<6x8xi32, #tpu.memory_space<vmem>>, vector<6x8xi32>
    %2 = tpu.iota {dimensions = array<i32: 2>} : vector<6x8x64xi32>
    %3 = vector.shape_cast %1 : vector<6x8xi32> to vector<6x8x1xi32>
    %4 = vector.broadcast %3 : vector<6x8x1xi32> to vector<6x8x64xi32>
    %5 = arith.cmpi eq, %4, %2 : vector<6x8x64xi32>
    %6 = arith.extui %5 : vector<6x8x64xi1> to vector<6x8x64xi32>
    %7 = arith.sitofp %6 : vector<6x8x64xi32> to vector<6x8x64xf32>
    %8 = vector.shape_cast %7 : vector<6x8x64xf32> to vector<48x64xf32>
    %cst = arith.constant dense<0.000000e+00> : vector<48x32xf32>
    %9 = tpu.matmul %8, %0, %cst {dimension_numbers = #tpu.dot_dimension_numbers<[1], [0], [0], [1], [0, 0, 1, 1], [], []>} : vector<48x64xf32>, vector<64x32xf32>, vector<48x32xf32> -> vector<48x32xf32>
    %10 = vector.shape_cast %9 : vector<48x32xf32> to vector<6x8x32xf32>
    %c0_3 = arith.constant 0 : index
    %c0_4 = arith.constant 0 : index
    %11 = vector.load %arg1[%c0_3, %c0_4] : memref<2x2xi32, #tpu.memory_space<vmem>>, vector<2x2xi32>
    %12 = tpu.iota {dimensions = array<i32: 2>} : vector<2x2x64xi32>
    %13 = vector.shape_cast %11 : vector<2x2xi32> to vector<2x2x1xi32>
    %14 = vector.broadcast %13 : vector<2x2x1xi32> to vector<2x2x64xi32>
    %15 = arith.cmpi eq, %14, %12 : vector<2x2x64xi32>
    %16 = arith.extui %15 : vector<2x2x64xi1> to vector<2x2x64xi32>
    %17 = arith.sitofp %16 : vector<2x2x64xi32> to vector<2x2x64xf32>
    %18 = vector.shape_cast %17 : vector<2x2x64xf32> to vector<4x64xf32>
    %cst_5 = arith.constant dense<0.000000e+00> : vector<4x32xf32>
    %19 = tpu.matmul %18, %0, %cst_5 {dimension_numbers = #tpu.dot_dimension_numbers<[1], [0], [0], [1], [0, 0, 1, 1], [], []>} : vector<4x64xf32>, vector<64x32xf32>, vector<4x32xf32> -> vector<4x32xf32>
    %c0_i32 = arith.constant 0 : i32
    %20 = vector.broadcast %c0_i32 : i32 to vector<6x8xi32>
    %21 = arith.cmpi eq, %1, %20 : vector<6x8xi32>
    %22 = arith.extui %21 : vector<6x8xi1> to vector<6x8xi32>
    %23 = arith.sitofp %22 : vector<6x8xi32> to vector<6x8xf32>
    %cst_6 = arith.constant -1.000000e+08 : f32
    %24 = vector.broadcast %cst_6 : f32 to vector<6x8xf32>
    %25 = arith.mulf %23, %24 : vector<6x8xf32>
    %c0_7 = arith.constant 0 : index
    %c0_8 = arith.constant 0 : index
    %26 = vector.load %arg3[%c0_7, %c0_8] : memref<8x32xf32, #tpu.memory_space<vmem>>, vector<8x32xf32>
    %27 = vector.shape_cast %26 : vector<8x32xf32> to vector<1x8x32xf32>
    %28 = vector.broadcast %27 : vector<1x8x32xf32> to vector<6x8x32xf32>
    %29 = arith.addf %10, %28 : vector<6x8x32xf32>
    %c0_9 = arith.constant 0 : index
    %c0_10 = arith.constant 0 : index
    %30 = vector.load %arg4[%c0_9, %c0_10] : memref<1x32xf32, #tpu.memory_space<vmem>>, vector<1x32xf32>
    %31 = vector.shape_cast %30 : vector<1x32xf32> to vector<32xf32>
    %c0_11 = arith.constant 0 : index
    %c0_12 = arith.constant 0 : index
    %32 = vector.load %arg5[%c0_11, %c0_12] : memref<1x32xf32, #tpu.memory_space<vmem>>, vector<1x32xf32>
    %33 = vector.shape_cast %32 : vector<1x32xf32> to vector<32xf32>
    %cst_13 = arith.constant dense<0.000000e+00> : vector<6x8xf32>
    %34 = vector.multi_reduction <add>, %29, %cst_13 [2] : vector<6x8x32xf32> to vector<6x8xf32>
    %35 = vector.shape_cast %34 : vector<6x8xf32> to vector<6x8x1xf32>
    %cst_14 = arith.constant 3.200000e+01 : f32
    %36 = vector.broadcast %cst_14 : f32 to vector<6x8x1xf32>
    %37 = arith.divf %35, %36 : vector<6x8x1xf32>
    %38 = vector.broadcast %37 : vector<6x8x1xf32> to vector<6x8x32xf32>
    %39 = arith.subf %29, %38 : vector<6x8x32xf32>
    %40 = arith.mulf %39, %39 : vector<6x8x32xf32>
    %cst_15 = arith.constant dense<0.000000e+00> : vector<6x8xf32>
    %41 = vector.multi_reduction <add>, %40, %cst_15 [2] : vector<6x8x32xf32> to vector<6x8xf32>
    %42 = vector.shape_cast %41 : vector<6x8xf32> to vector<6x8x1xf32>
    %cst_16 = arith.constant 3.200000e+01 : f32
    %43 = vector.broadcast %cst_16 : f32 to vector<6x8x1xf32>
    %44 = arith.divf %42, %43 : vector<6x8x1xf32>
    %45 = vector.broadcast %37 : vector<6x8x1xf32> to vector<6x8x32xf32>
    %46 = arith.subf %29, %45 : vector<6x8x32xf32>
    %cst_17 = arith.constant 9.99999996E-13 : f32
    %47 = vector.broadcast %cst_17 : f32 to vector<6x8x1xf32>
    %48 = arith.addf %44, %47 : vector<6x8x1xf32>
    %49 = math.rsqrt %48 : vector<6x8x1xf32>
    %50 = vector.broadcast %49 : vector<6x8x1xf32> to vector<6x8x32xf32>
    %51 = arith.mulf %46, %50 : vector<6x8x32xf32>
    %52 = vector.shape_cast %31 : vector<32xf32> to vector<1x1x32xf32>
    %53 = vector.broadcast %52 : vector<1x1x32xf32> to vector<6x8x32xf32>
    %54 = arith.mulf %51, %53 : vector<6x8x32xf32>
    %55 = vector.shape_cast %33 : vector<32xf32> to vector<1x1x32xf32>
    %56 = vector.broadcast %55 : vector<1x1x32xf32> to vector<6x8x32xf32>
    %57 = arith.addf %54, %56 : vector<6x8x32xf32>
    %58 = tpu.iota {dimensions = array<i32: 0>} : vector<6x1x1xi32>
    %c2_i32 = arith.constant 2 : i32
    %59 = vector.broadcast %c2_i32 : i32 to vector<6x1x1xi32>
    %60 = arith.cmpi slt, %58, %59 : vector<6x1x1xi32>
    %61 = vector.shape_cast %60 : vector<6x1x1xi1> to vector<6x1x1xi1>
    %62 = vector.broadcast %61 : vector<6x1x1xi1> to vector<6x8x32xi1>
    %63 = arith.select %62, %57, %10 : vector<6x8x32xi1>, vector<6x8x32xf32>
    %c0_18 = arith.constant 0 : index
    %c0_19 = arith.constant 0 : index
    %c0_20 = arith.constant 0 : index
    %c0_21 = arith.constant 0 : index
    %64 = vector.load %arg6[%c0_18, %c0_19, %c0_20, %c0_21] : memref<6x2x32x32xf32, #tpu.memory_space<vmem>>, vector<6x2x32x32xf32>
    %c0_22 = arith.constant 0 : index
    %c0_23 = arith.constant 0 : index
    %c0_24 = arith.constant 0 : index
    %65 = vector.load %arg7[%c0_22, %c0_23, %c0_24] : memref<6x2x32xf32, #tpu.memory_space<vmem>>, vector<6x2x32xf32>
    %c0_25 = arith.constant 0 : index
    %c0_26 = arith.constant 0 : index
    %c0_27 = arith.constant 0 : index
    %c0_28 = arith.constant 0 : index
    %66 = vector.load %arg8[%c0_25, %c0_26, %c0_27, %c0_28] : memref<6x2x32x32xf32, #tpu.memory_space<vmem>>, vector<6x2x32x32xf32>
    %c0_29 = arith.constant 0 : index
    %c0_30 = arith.constant 0 : index
    %c0_31 = arith.constant 0 : index
    %67 = vector.load %arg9[%c0_29, %c0_30, %c0_31] : memref<6x2x32xf32, #tpu.memory_space<vmem>>, vector<6x2x32xf32>
    %c0_32 = arith.constant 0 : index
    %c0_33 = arith.constant 0 : index
    %c0_34 = arith.constant 0 : index
    %c0_35 = arith.constant 0 : index
    %68 = vector.load %arg10[%c0_32, %c0_33, %c0_34, %c0_35] : memref<6x2x32x32xf32, #tpu.memory_space<vmem>>, vector<6x2x32x32xf32>
    %c0_36 = arith.constant 0 : index
    %c0_37 = arith.constant 0 : index
    %c0_38 = arith.constant 0 : index
    %69 = vector.load %arg11[%c0_36, %c0_37, %c0_38] : memref<6x2x32xf32, #tpu.memory_space<vmem>>, vector<6x2x32xf32>
    %c0_39 = arith.constant 0 : index
    %c0_40 = arith.constant 0 : index
    %c0_41 = arith.constant 0 : index
    %c0_42 = arith.constant 0 : index
    %70 = vector.load %arg12[%c0_39, %c0_40, %c0_41, %c0_42] : memref<6x2x32x32xf32, #tpu.memory_space<vmem>>, vector<6x2x32x32xf32>
    %c0_43 = arith.constant 0 : index
    %c0_44 = arith.constant 0 : index
    %c0_45 = arith.constant 0 : index
    %71 = vector.load %arg13[%c0_43, %c0_44, %c0_45] : memref<6x2x32xf32, #tpu.memory_space<vmem>>, vector<6x2x32xf32>
    %c0_46 = arith.constant 0 : index
    %c0_47 = arith.constant 0 : index
    %c0_48 = arith.constant 0 : index
    %72 = vector.load %arg14[%c0_46, %c0_47, %c0_48] : memref<6x2x32xf32, #tpu.memory_space<vmem>>, vector<6x2x32xf32>
    %c0_49 = arith.constant 0 : index
    %c0_50 = arith.constant 0 : index
    %c0_51 = arith.constant 0 : index
    %73 = vector.load %arg15[%c0_49, %c0_50, %c0_51] : memref<6x2x32xf32, #tpu.memory_space<vmem>>, vector<6x2x32xf32>
    %c0_52 = arith.constant 0 : index
    %c0_53 = arith.constant 0 : index
    %c0_54 = arith.constant 0 : index
    %c0_55 = arith.constant 0 : index
    %74 = vector.load %arg16[%c0_52, %c0_53, %c0_54, %c0_55] : memref<6x2x32x128xf32, #tpu.memory_space<vmem>>, vector<6x2x32x128xf32>
    %c0_56 = arith.constant 0 : index
    %c0_57 = arith.constant 0 : index
    %c0_58 = arith.constant 0 : index
    %75 = vector.load %arg17[%c0_56, %c0_57, %c0_58] : memref<6x2x128xf32, #tpu.memory_space<vmem>>, vector<6x2x128xf32>
    %c0_59 = arith.constant 0 : index
    %c0_60 = arith.constant 0 : index
    %c0_61 = arith.constant 0 : index
    %c0_62 = arith.constant 0 : index
    %76 = vector.load %arg18[%c0_59, %c0_60, %c0_61, %c0_62] : memref<6x2x128x32xf32, #tpu.memory_space<vmem>>, vector<6x2x128x32xf32>
    %c0_63 = arith.constant 0 : index
    %c0_64 = arith.constant 0 : index
    %c0_65 = arith.constant 0 : index
    %77 = vector.load %arg19[%c0_63, %c0_64, %c0_65] : memref<6x2x32xf32, #tpu.memory_space<vmem>>, vector<6x2x32xf32>
    %c0_66 = arith.constant 0 : index
    %c0_67 = arith.constant 0 : index
    %c0_68 = arith.constant 0 : index
    %78 = vector.load %arg20[%c0_66, %c0_67, %c0_68] : memref<6x2x32xf32, #tpu.memory_space<vmem>>, vector<6x2x32xf32>
    %c0_69 = arith.constant 0 : index
    %c0_70 = arith.constant 0 : index
    %c0_71 = arith.constant 0 : index
    %79 = vector.load %arg21[%c0_69, %c0_70, %c0_71] : memref<6x2x32xf32, #tpu.memory_space<vmem>>, vector<6x2x32xf32>
    %80 = vector.extract_strided_slice %64 {offsets = [0, 0, 0, 0], sizes = [6, 1, 32, 32], strides = [1, 1, 1, 1]} : vector<6x2x32x32xf32> to vector<6x1x32x32xf32>
    %81 = vector.shape_cast %80 : vector<6x1x32x32xf32> to vector<6x32x32xf32>
    "tpu.trace_start"() <{level = 10 : i32, message = "bsd,bde->bse"}> : () -> ()
    %cst_72 = arith.constant dense<0.000000e+00> : vector<6x8x32xf32>
    %82 = tpu.matmul %63, %81, %cst_72 {dimension_numbers = #tpu.dot_dimension_numbers<[2], [1], [1], [2], [0, 0, 0, 1, 1, 2], [0], [0]>} : vector<6x8x32xf32>, vector<6x32x32xf32>, vector<6x8x32xf32> -> vector<6x8x32xf32>
    "tpu.trace_stop"() : () -> ()
    %83 = vector.extract_strided_slice %65 {offsets = [0, 0, 0], sizes = [6, 1, 32], strides = [1, 1, 1]} : vector<6x2x32xf32> to vector<6x1x32xf32>
    %84 = vector.shape_cast %83 : vector<6x1x32xf32> to vector<6x32xf32>
    %85 = vector.shape_cast %84 : vector<6x32xf32> to vector<6x1x32xf32>
    %86 = vector.broadcast %85 : vector<6x1x32xf32> to vector<6x8x32xf32>
    %87 = arith.addf %82, %86 : vector<6x8x32xf32>
    %88 = vector.extract_strided_slice %66 {offsets = [0, 0, 0, 0], sizes = [6, 1, 32, 32], strides = [1, 1, 1, 1]} : vector<6x2x32x32xf32> to vector<6x1x32x32xf32>
    %89 = vector.shape_cast %88 : vector<6x1x32x32xf32> to vector<6x32x32xf32>
    "tpu.trace_start"() <{level = 10 : i32, message = "bsd,bde->bse"}> : () -> ()
    %cst_73 = arith.constant dense<0.000000e+00> : vector<6x8x32xf32>
    %90 = tpu.matmul %63, %89, %cst_73 {dimension_numbers = #tpu.dot_dimension_numbers<[2], [1], [1], [2], [0, 0, 0, 1, 1, 2], [0], [0]>} : vector<6x8x32xf32>, vector<6x32x32xf32>, vector<6x8x32xf32> -> vector<6x8x32xf32>
    "tpu.trace_stop"() : () -> ()
    %91 = vector.extract_strided_slice %67 {offsets = [0, 0, 0], sizes = [6, 1, 32], strides = [1, 1, 1]} : vector<6x2x32xf32> to vector<6x1x32xf32>
    %92 = vector.shape_cast %91 : vector<6x1x32xf32> to vector<6x32xf32>
    %93 = vector.shape_cast %92 : vector<6x32xf32> to vector<6x1x32xf32>
    %94 = vector.broadcast %93 : vector<6x1x32xf32> to vector<6x8x32xf32>
    %95 = arith.addf %90, %94 : vector<6x8x32xf32>
    %96 = vector.extract_strided_slice %68 {offsets = [0, 0, 0, 0], sizes = [6, 1, 32, 32], strides = [1, 1, 1, 1]} : vector<6x2x32x32xf32> to vector<6x1x32x32xf32>
    %97 = vector.shape_cast %96 : vector<6x1x32x32xf32> to vector<6x32x32xf32>
    "tpu.trace_start"() <{level = 10 : i32, message = "bsd,bde->bse"}> : () -> ()
    %cst_74 = arith.constant dense<0.000000e+00> : vector<6x8x32xf32>
    %98 = tpu.matmul %63, %97, %cst_74 {dimension_numbers = #tpu.dot_dimension_numbers<[2], [1], [1], [2], [0, 0, 0, 1, 1, 2], [0], [0]>} : vector<6x8x32xf32>, vector<6x32x32xf32>, vector<6x8x32xf32> -> vector<6x8x32xf32>
    "tpu.trace_stop"() : () -> ()
    %99 = vector.extract_strided_slice %69 {offsets = [0, 0, 0], sizes = [6, 1, 32], strides = [1, 1, 1]} : vector<6x2x32xf32> to vector<6x1x32xf32>
    %100 = vector.shape_cast %99 : vector<6x1x32xf32> to vector<6x32xf32>
    %101 = vector.shape_cast %100 : vector<6x32xf32> to vector<6x1x32xf32>
    %102 = vector.broadcast %101 : vector<6x1x32xf32> to vector<6x8x32xf32>
    %103 = arith.addf %98, %102 : vector<6x8x32xf32>
    %104 = vector.extract_strided_slice %87 {offsets = [0, 0, 0], sizes = [6, 8, 16], strides = [1, 1, 1]} : vector<6x8x32xf32> to vector<6x8x16xf32>
    %105 = vector.extract_strided_slice %95 {offsets = [0, 0, 0], sizes = [6, 8, 16], strides = [1, 1, 1]} : vector<6x8x32xf32> to vector<6x8x16xf32>
    %106 = vector.extract_strided_slice %103 {offsets = [0, 0, 0], sizes = [6, 8, 16], strides = [1, 1, 1]} : vector<6x8x32xf32> to vector<6x8x16xf32>
    "tpu.trace_start"() <{level = 10 : i32, message = "bqd,bkd->bqk"}> : () -> ()
    %cst_75 = arith.constant dense<0.000000e+00> : vector<6x8x8xf32>
    %107 = tpu.matmul %104, %105, %cst_75 {dimension_numbers = #tpu.dot_dimension_numbers<[2], [2], [1], [1], [0, 0, 0, 1, 1, 1], [0], [0]>} : vector<6x8x16xf32>, vector<6x8x16xf32>, vector<6x8x8xf32> -> vector<6x8x8xf32>
    "tpu.trace_stop"() : () -> ()
    %cst_76 = arith.constant 2.500000e-01 : f32
    %108 = vector.broadcast %cst_76 : f32 to vector<6x8x8xf32>
    %109 = arith.mulf %107, %108 : vector<6x8x8xf32>
    %110 = vector.shape_cast %25 : vector<6x8xf32> to vector<6x1x8xf32>
    %111 = vector.broadcast %110 : vector<6x1x8xf32> to vector<6x8x8xf32>
    %112 = arith.addf %109, %111 : vector<6x8x8xf32>
    %cst_77 = arith.constant dense<0xFF800000> : vector<6x8xf32>
    %113 = vector.multi_reduction <maximumf>, %112, %cst_77 [2] : vector<6x8x8xf32> to vector<6x8xf32>
    %114 = vector.shape_cast %113 : vector<6x8xf32> to vector<6x8x1xf32>
    %115 = vector.broadcast %114 : vector<6x8x1xf32> to vector<6x8x8xf32>
    %116 = arith.subf %112, %115 : vector<6x8x8xf32>
    %117 = math.exp %116 : vector<6x8x8xf32>
    %cst_78 = arith.constant dense<0.000000e+00> : vector<6x8xf32>
    %118 = vector.multi_reduction <add>, %117, %cst_78 [2] : vector<6x8x8xf32> to vector<6x8xf32>
    %119 = vector.shape_cast %118 : vector<6x8xf32> to vector<6x8x1xf32>
    %120 = tpu.reciprocal %119 {approx = true} : vector<6x8x1xf32> -> vector<6x8x1xf32>
    %121 = vector.broadcast %120 : vector<6x8x1xf32> to vector<6x8x8xf32>
    %122 = arith.mulf %117, %121 : vector<6x8x8xf32>
    "tpu.trace_start"() <{level = 10 : i32, message = "bqk,bkd->bqd"}> : () -> ()
    %cst_79 = arith.constant dense<0.000000e+00> : vector<6x8x16xf32>
    %123 = tpu.matmul %122, %106, %cst_79 {dimension_numbers = #tpu.dot_dimension_numbers<[2], [1], [1], [2], [0, 0, 0, 1, 1, 2], [0], [0]>} : vector<6x8x8xf32>, vector<6x8x16xf32>, vector<6x8x16xf32> -> vector<6x8x16xf32>
    "tpu.trace_stop"() : () -> ()
    %124 = vector.extract_strided_slice %87 {offsets = [0, 0, 16], sizes = [6, 8, 16], strides = [1, 1, 1]} : vector<6x8x32xf32> to vector<6x8x16xf32>
    %125 = vector.extract_strided_slice %95 {offsets = [0, 0, 16], sizes = [6, 8, 16], strides = [1, 1, 1]} : vector<6x8x32xf32> to vector<6x8x16xf32>
    %126 = vector.extract_strided_slice %103 {offsets = [0, 0, 16], sizes = [6, 8, 16], strides = [1, 1, 1]} : vector<6x8x32xf32> to vector<6x8x16xf32>
    "tpu.trace_start"() <{level = 10 : i32, message = "bqd,bkd->bqk"}> : () -> ()
    %cst_80 = arith.constant dense<0.000000e+00> : vector<6x8x8xf32>
    %127 = tpu.matmul %124, %125, %cst_80 {dimension_numbers = #tpu.dot_dimension_numbers<[2], [2], [1], [1], [0, 0, 0, 1, 1, 1], [0], [0]>} : vector<6x8x16xf32>, vector<6x8x16xf32>, vector<6x8x8xf32> -> vector<6x8x8xf32>
    "tpu.trace_stop"() : () -> ()
    %cst_81 = arith.constant 2.500000e-01 : f32
    %128 = vector.broadcast %cst_81 : f32 to vector<6x8x8xf32>
    %129 = arith.mulf %127, %128 : vector<6x8x8xf32>
    %130 = vector.shape_cast %25 : vector<6x8xf32> to vector<6x1x8xf32>
    %131 = vector.broadcast %130 : vector<6x1x8xf32> to vector<6x8x8xf32>
    %132 = arith.addf %129, %131 : vector<6x8x8xf32>
    %cst_82 = arith.constant dense<0xFF800000> : vector<6x8xf32>
    %133 = vector.multi_reduction <maximumf>, %132, %cst_82 [2] : vector<6x8x8xf32> to vector<6x8xf32>
    %134 = vector.shape_cast %133 : vector<6x8xf32> to vector<6x8x1xf32>
    %135 = vector.broadcast %134 : vector<6x8x1xf32> to vector<6x8x8xf32>
    %136 = arith.subf %132, %135 : vector<6x8x8xf32>
    %137 = math.exp %136 : vector<6x8x8xf32>
    %cst_83 = arith.constant dense<0.000000e+00> : vector<6x8xf32>
    %138 = vector.multi_reduction <add>, %137, %cst_83 [2] : vector<6x8x8xf32> to vector<6x8xf32>
    %139 = vector.shape_cast %138 : vector<6x8xf32> to vector<6x8x1xf32>
    %140 = tpu.reciprocal %139 {approx = true} : vector<6x8x1xf32> -> vector<6x8x1xf32>
    %141 = vector.broadcast %140 : vector<6x8x1xf32> to vector<6x8x8xf32>
    %142 = arith.mulf %137, %141 : vector<6x8x8xf32>
    "tpu.trace_start"() <{level = 10 : i32, message = "bqk,bkd->bqd"}> : () -> ()
    %cst_84 = arith.constant dense<0.000000e+00> : vector<6x8x16xf32>
    %143 = tpu.matmul %142, %126, %cst_84 {dimension_numbers = #tpu.dot_dimension_numbers<[2], [1], [1], [2], [0, 0, 0, 1, 1, 2], [0], [0]>} : vector<6x8x8xf32>, vector<6x8x16xf32>, vector<6x8x16xf32> -> vector<6x8x16xf32>
    "tpu.trace_stop"() : () -> ()
    %144 = tpu.concatenate %123, %143 in 2 : vector<6x8x16xf32>, vector<6x8x16xf32> -> vector<6x8x32xf32>
    %145 = vector.extract_strided_slice %70 {offsets = [0, 0, 0, 0], sizes = [6, 1, 32, 32], strides = [1, 1, 1, 1]} : vector<6x2x32x32xf32> to vector<6x1x32x32xf32>
    %146 = vector.shape_cast %145 : vector<6x1x32x32xf32> to vector<6x32x32xf32>
    "tpu.trace_start"() <{level = 10 : i32, message = "bsd,bde->bse"}> : () -> ()
    %cst_85 = arith.constant dense<0.000000e+00> : vector<6x8x32xf32>
    %147 = tpu.matmul %144, %146, %cst_85 {dimension_numbers = #tpu.dot_dimension_numbers<[2], [1], [1], [2], [0, 0, 0, 1, 1, 2], [0], [0]>} : vector<6x8x32xf32>, vector<6x32x32xf32>, vector<6x8x32xf32> -> vector<6x8x32xf32>
    "tpu.trace_stop"() : () -> ()
    %148 = vector.extract_strided_slice %71 {offsets = [0, 0, 0], sizes = [6, 1, 32], strides = [1, 1, 1]} : vector<6x2x32xf32> to vector<6x1x32xf32>
    %149 = vector.shape_cast %148 : vector<6x1x32xf32> to vector<6x32xf32>
    %150 = vector.shape_cast %149 : vector<6x32xf32> to vector<6x1x32xf32>
    %151 = vector.broadcast %150 : vector<6x1x32xf32> to vector<6x8x32xf32>
    %152 = arith.addf %147, %151 : vector<6x8x32xf32>
    %153 = arith.addf %152, %63 : vector<6x8x32xf32>
    %154 = vector.extract_strided_slice %72 {offsets = [0, 0, 0], sizes = [6, 1, 32], strides = [1, 1, 1]} : vector<6x2x32xf32> to vector<6x1x32xf32>
    %155 = vector.shape_cast %154 : vector<6x1x32xf32> to vector<6x32xf32>
    %156 = vector.shape_cast %155 : vector<6x32xf32> to vector<6x1x32xf32>
    %157 = vector.extract_strided_slice %73 {offsets = [0, 0, 0], sizes = [6, 1, 32], strides = [1, 1, 1]} : vector<6x2x32xf32> to vector<6x1x32xf32>
    %158 = vector.shape_cast %157 : vector<6x1x32xf32> to vector<6x32xf32>
    %159 = vector.shape_cast %158 : vector<6x32xf32> to vector<6x1x32xf32>
    %cst_86 = arith.constant dense<0.000000e+00> : vector<6x8xf32>
    %160 = vector.multi_reduction <add>, %153, %cst_86 [2] : vector<6x8x32xf32> to vector<6x8xf32>
    %161 = vector.shape_cast %160 : vector<6x8xf32> to vector<6x8x1xf32>
    %cst_87 = arith.constant 3.200000e+01 : f32
    %162 = vector.broadcast %cst_87 : f32 to vector<6x8x1xf32>
    %163 = arith.divf %161, %162 : vector<6x8x1xf32>
    %164 = vector.broadcast %163 : vector<6x8x1xf32> to vector<6x8x32xf32>
    %165 = arith.subf %153, %164 : vector<6x8x32xf32>
    %166 = arith.mulf %165, %165 : vector<6x8x32xf32>
    %cst_88 = arith.constant dense<0.000000e+00> : vector<6x8xf32>
    %167 = vector.multi_reduction <add>, %166, %cst_88 [2] : vector<6x8x32xf32> to vector<6x8xf32>
    %168 = vector.shape_cast %167 : vector<6x8xf32> to vector<6x8x1xf32>
    %cst_89 = arith.constant 3.200000e+01 : f32
    %169 = vector.broadcast %cst_89 : f32 to vector<6x8x1xf32>
    %170 = arith.divf %168, %169 : vector<6x8x1xf32>
    %171 = vector.broadcast %163 : vector<6x8x1xf32> to vector<6x8x32xf32>
    %172 = arith.subf %153, %171 : vector<6x8x32xf32>
    %cst_90 = arith.constant 9.99999996E-13 : f32
    %173 = vector.broadcast %cst_90 : f32 to vector<6x8x1xf32>
    %174 = arith.addf %170, %173 : vector<6x8x1xf32>
    %175 = math.rsqrt %174 : vector<6x8x1xf32>
    %176 = vector.broadcast %175 : vector<6x8x1xf32> to vector<6x8x32xf32>
    %177 = arith.mulf %172, %176 : vector<6x8x32xf32>
    %178 = vector.broadcast %156 : vector<6x1x32xf32> to vector<6x8x32xf32>
    %179 = arith.mulf %177, %178 : vector<6x8x32xf32>
    %180 = vector.broadcast %159 : vector<6x1x32xf32> to vector<6x8x32xf32>
    %181 = arith.addf %179, %180 : vector<6x8x32xf32>
    %182 = vector.extract_strided_slice %74 {offsets = [0, 0, 0, 0], sizes = [6, 1, 32, 128], strides = [1, 1, 1, 1]} : vector<6x2x32x128xf32> to vector<6x1x32x128xf32>
    %183 = vector.shape_cast %182 : vector<6x1x32x128xf32> to vector<6x32x128xf32>
    "tpu.trace_start"() <{level = 10 : i32, message = "bsd,bdf->bsf"}> : () -> ()
    %cst_91 = arith.constant dense<0.000000e+00> : vector<6x8x128xf32>
    %184 = tpu.matmul %181, %183, %cst_91 {dimension_numbers = #tpu.dot_dimension_numbers<[2], [1], [1], [2], [0, 0, 0, 1, 1, 2], [0], [0]>} : vector<6x8x32xf32>, vector<6x32x128xf32>, vector<6x8x128xf32> -> vector<6x8x128xf32>
    "tpu.trace_stop"() : () -> ()
    %185 = vector.extract_strided_slice %75 {offsets = [0, 0, 0], sizes = [6, 1, 128], strides = [1, 1, 1]} : vector<6x2x128xf32> to vector<6x1x128xf32>
    %186 = vector.shape_cast %185 : vector<6x1x128xf32> to vector<6x128xf32>
    %187 = vector.shape_cast %186 : vector<6x128xf32> to vector<6x1x128xf32>
    %188 = vector.broadcast %187 : vector<6x1x128xf32> to vector<6x8x128xf32>
    %189 = arith.addf %184, %188 : vector<6x8x128xf32>
    %190 = arith.mulf %189, %189 : vector<6x8x128xf32>
    %191 = arith.mulf %189, %190 : vector<6x8x128xf32>
    %cst_92 = arith.constant 4.471500e-02 : f32
    %192 = vector.broadcast %cst_92 : f32 to vector<6x8x128xf32>
    %193 = arith.mulf %192, %191 : vector<6x8x128xf32>
    %194 = arith.addf %189, %193 : vector<6x8x128xf32>
    %cst_93 = arith.constant 0.797884583 : f32
    %195 = vector.broadcast %cst_93 : f32 to vector<6x8x128xf32>
    %196 = arith.mulf %195, %194 : vector<6x8x128xf32>
    %197 = math.tanh %196 : vector<6x8x128xf32>
    %cst_94 = arith.constant 1.000000e+00 : f32
    %198 = vector.broadcast %cst_94 : f32 to vector<6x8x128xf32>
    %199 = arith.addf %198, %197 : vector<6x8x128xf32>
    %cst_95 = arith.constant 5.000000e-01 : f32
    %200 = vector.broadcast %cst_95 : f32 to vector<6x8x128xf32>
    %201 = arith.mulf %200, %199 : vector<6x8x128xf32>
    %202 = arith.mulf %189, %201 : vector<6x8x128xf32>
    %203 = vector.extract_strided_slice %76 {offsets = [0, 0, 0, 0], sizes = [6, 1, 128, 32], strides = [1, 1, 1, 1]} : vector<6x2x128x32xf32> to vector<6x1x128x32xf32>
    %204 = vector.shape_cast %203 : vector<6x1x128x32xf32> to vector<6x128x32xf32>
    "tpu.trace_start"() <{level = 10 : i32, message = "bsf,bfd->bsd"}> : () -> ()
    %cst_96 = arith.constant dense<0.000000e+00> : vector<6x8x32xf32>
    %205 = tpu.matmul %202, %204, %cst_96 {dimension_numbers = #tpu.dot_dimension_numbers<[2], [1], [1], [2], [0, 0, 0, 1, 1, 2], [0], [0]>} : vector<6x8x128xf32>, vector<6x128x32xf32>, vector<6x8x32xf32> -> vector<6x8x32xf32>
    "tpu.trace_stop"() : () -> ()
    %206 = vector.extract_strided_slice %77 {offsets = [0, 0, 0], sizes = [6, 1, 32], strides = [1, 1, 1]} : vector<6x2x32xf32> to vector<6x1x32xf32>
    %207 = vector.shape_cast %206 : vector<6x1x32xf32> to vector<6x32xf32>
    %208 = vector.shape_cast %207 : vector<6x32xf32> to vector<6x1x32xf32>
    %209 = vector.broadcast %208 : vector<6x1x32xf32> to vector<6x8x32xf32>
    %210 = arith.addf %205, %209 : vector<6x8x32xf32>
    %211 = arith.addf %210, %181 : vector<6x8x32xf32>
    %212 = vector.extract_strided_slice %78 {offsets = [0, 0, 0], sizes = [6, 1, 32], strides = [1, 1, 1]} : vector<6x2x32xf32> to vector<6x1x32xf32>
    %213 = vector.shape_cast %212 : vector<6x1x32xf32> to vector<6x32xf32>
    %214 = vector.shape_cast %213 : vector<6x32xf32> to vector<6x1x32xf32>
    %215 = vector.extract_strided_slice %79 {offsets = [0, 0, 0], sizes = [6, 1, 32], strides = [1, 1, 1]} : vector<6x2x32xf32> to vector<6x1x32xf32>
    %216 = vector.shape_cast %215 : vector<6x1x32xf32> to vector<6x32xf32>
    %217 = vector.shape_cast %216 : vector<6x32xf32> to vector<6x1x32xf32>
    %cst_97 = arith.constant dense<0.000000e+00> : vector<6x8xf32>
    %218 = vector.multi_reduction <add>, %211, %cst_97 [2] : vector<6x8x32xf32> to vector<6x8xf32>
    %219 = vector.shape_cast %218 : vector<6x8xf32> to vector<6x8x1xf32>
    %cst_98 = arith.constant 3.200000e+01 : f32
    %220 = vector.broadcast %cst_98 : f32 to vector<6x8x1xf32>
    %221 = arith.divf %219, %220 : vector<6x8x1xf32>
    %222 = vector.broadcast %221 : vector<6x8x1xf32> to vector<6x8x32xf32>
    %223 = arith.subf %211, %222 : vector<6x8x32xf32>
    %224 = arith.mulf %223, %223 : vector<6x8x32xf32>
    %cst_99 = arith.constant dense<0.000000e+00> : vector<6x8xf32>
    %225 = vector.multi_reduction <add>, %224, %cst_99 [2] : vector<6x8x32xf32> to vector<6x8xf32>
    %226 = vector.shape_cast %225 : vector<6x8xf32> to vector<6x8x1xf32>
    %cst_100 = arith.constant 3.200000e+01 : f32
    %227 = vector.broadcast %cst_100 : f32 to vector<6x8x1xf32>
    %228 = arith.divf %226, %227 : vector<6x8x1xf32>
    %229 = vector.broadcast %221 : vector<6x8x1xf32> to vector<6x8x32xf32>
    %230 = arith.subf %211, %229 : vector<6x8x32xf32>
    %cst_101 = arith.constant 9.99999996E-13 : f32
    %231 = vector.broadcast %cst_101 : f32 to vector<6x8x1xf32>
    %232 = arith.addf %228, %231 : vector<6x8x1xf32>
    %233 = math.rsqrt %232 : vector<6x8x1xf32>
    %234 = vector.broadcast %233 : vector<6x8x1xf32> to vector<6x8x32xf32>
    %235 = arith.mulf %230, %234 : vector<6x8x32xf32>
    %236 = vector.broadcast %214 : vector<6x1x32xf32> to vector<6x8x32xf32>
    %237 = arith.mulf %235, %236 : vector<6x8x32xf32>
    %238 = vector.broadcast %217 : vector<6x1x32xf32> to vector<6x8x32xf32>
    %239 = arith.addf %237, %238 : vector<6x8x32xf32>
    %240 = vector.extract_strided_slice %64 {offsets = [0, 1, 0, 0], sizes = [6, 1, 32, 32], strides = [1, 1, 1, 1]} : vector<6x2x32x32xf32> to vector<6x1x32x32xf32>
    %241 = vector.shape_cast %240 : vector<6x1x32x32xf32> to vector<6x32x32xf32>
    "tpu.trace_start"() <{level = 10 : i32, message = "bsd,bde->bse"}> : () -> ()
    %cst_102 = arith.constant dense<0.000000e+00> : vector<6x8x32xf32>
    %242 = tpu.matmul %239, %241, %cst_102 {dimension_numbers = #tpu.dot_dimension_numbers<[2], [1], [1], [2], [0, 0, 0, 1, 1, 2], [0], [0]>} : vector<6x8x32xf32>, vector<6x32x32xf32>, vector<6x8x32xf32> -> vector<6x8x32xf32>
    "tpu.trace_stop"() : () -> ()
    %243 = vector.extract_strided_slice %65 {offsets = [0, 1, 0], sizes = [6, 1, 32], strides = [1, 1, 1]} : vector<6x2x32xf32> to vector<6x1x32xf32>
    %244 = vector.shape_cast %243 : vector<6x1x32xf32> to vector<6x32xf32>
    %245 = vector.shape_cast %244 : vector<6x32xf32> to vector<6x1x32xf32>
    %246 = vector.broadcast %245 : vector<6x1x32xf32> to vector<6x8x32xf32>
    %247 = arith.addf %242, %246 : vector<6x8x32xf32>
    %248 = vector.extract_strided_slice %66 {offsets = [0, 1, 0, 0], sizes = [6, 1, 32, 32], strides = [1, 1, 1, 1]} : vector<6x2x32x32xf32> to vector<6x1x32x32xf32>
    %249 = vector.shape_cast %248 : vector<6x1x32x32xf32> to vector<6x32x32xf32>
    "tpu.trace_start"() <{level = 10 : i32, message = "bsd,bde->bse"}> : () -> ()
    %cst_103 = arith.constant dense<0.000000e+00> : vector<6x8x32xf32>
    %250 = tpu.matmul %239, %249, %cst_103 {dimension_numbers = #tpu.dot_dimension_numbers<[2], [1], [1], [2], [0, 0, 0, 1, 1, 2], [0], [0]>} : vector<6x8x32xf32>, vector<6x32x32xf32>, vector<6x8x32xf32> -> vector<6x8x32xf32>
    "tpu.trace_stop"() : () -> ()
    %251 = vector.extract_strided_slice %67 {offsets = [0, 1, 0], sizes = [6, 1, 32], strides = [1, 1, 1]} : vector<6x2x32xf32> to vector<6x1x32xf32>
    %252 = vector.shape_cast %251 : vector<6x1x32xf32> to vector<6x32xf32>
    %253 = vector.shape_cast %252 : vector<6x32xf32> to vector<6x1x32xf32>
    %254 = vector.broadcast %253 : vector<6x1x32xf32> to vector<6x8x32xf32>
    %255 = arith.addf %250, %254 : vector<6x8x32xf32>
    %256 = vector.extract_strided_slice %68 {offsets = [0, 1, 0, 0], sizes = [6, 1, 32, 32], strides = [1, 1, 1, 1]} : vector<6x2x32x32xf32> to vector<6x1x32x32xf32>
    %257 = vector.shape_cast %256 : vector<6x1x32x32xf32> to vector<6x32x32xf32>
    "tpu.trace_start"() <{level = 10 : i32, message = "bsd,bde->bse"}> : () -> ()
    %cst_104 = arith.constant dense<0.000000e+00> : vector<6x8x32xf32>
    %258 = tpu.matmul %239, %257, %cst_104 {dimension_numbers = #tpu.dot_dimension_numbers<[2], [1], [1], [2], [0, 0, 0, 1, 1, 2], [0], [0]>} : vector<6x8x32xf32>, vector<6x32x32xf32>, vector<6x8x32xf32> -> vector<6x8x32xf32>
    "tpu.trace_stop"() : () -> ()
    %259 = vector.extract_strided_slice %69 {offsets = [0, 1, 0], sizes = [6, 1, 32], strides = [1, 1, 1]} : vector<6x2x32xf32> to vector<6x1x32xf32>
    %260 = vector.shape_cast %259 : vector<6x1x32xf32> to vector<6x32xf32>
    %261 = vector.shape_cast %260 : vector<6x32xf32> to vector<6x1x32xf32>
    %262 = vector.broadcast %261 : vector<6x1x32xf32> to vector<6x8x32xf32>
    %263 = arith.addf %258, %262 : vector<6x8x32xf32>
    %264 = vector.extract_strided_slice %247 {offsets = [0, 0, 0], sizes = [6, 8, 16], strides = [1, 1, 1]} : vector<6x8x32xf32> to vector<6x8x16xf32>
    %265 = vector.extract_strided_slice %255 {offsets = [0, 0, 0], sizes = [6, 8, 16], strides = [1, 1, 1]} : vector<6x8x32xf32> to vector<6x8x16xf32>
    %266 = vector.extract_strided_slice %263 {offsets = [0, 0, 0], sizes = [6, 8, 16], strides = [1, 1, 1]} : vector<6x8x32xf32> to vector<6x8x16xf32>
    "tpu.trace_start"() <{level = 10 : i32, message = "bqd,bkd->bqk"}> : () -> ()
    %cst_105 = arith.constant dense<0.000000e+00> : vector<6x8x8xf32>
    %267 = tpu.matmul %264, %265, %cst_105 {dimension_numbers = #tpu.dot_dimension_numbers<[2], [2], [1], [1], [0, 0, 0, 1, 1, 1], [0], [0]>} : vector<6x8x16xf32>, vector<6x8x16xf32>, vector<6x8x8xf32> -> vector<6x8x8xf32>
    "tpu.trace_stop"() : () -> ()
    %cst_106 = arith.constant 2.500000e-01 : f32
    %268 = vector.broadcast %cst_106 : f32 to vector<6x8x8xf32>
    %269 = arith.mulf %267, %268 : vector<6x8x8xf32>
    %270 = vector.shape_cast %25 : vector<6x8xf32> to vector<6x1x8xf32>
    %271 = vector.broadcast %270 : vector<6x1x8xf32> to vector<6x8x8xf32>
    %272 = arith.addf %269, %271 : vector<6x8x8xf32>
    %cst_107 = arith.constant dense<0xFF800000> : vector<6x8xf32>
    %273 = vector.multi_reduction <maximumf>, %272, %cst_107 [2] : vector<6x8x8xf32> to vector<6x8xf32>
    %274 = vector.shape_cast %273 : vector<6x8xf32> to vector<6x8x1xf32>
    %275 = vector.broadcast %274 : vector<6x8x1xf32> to vector<6x8x8xf32>
    %276 = arith.subf %272, %275 : vector<6x8x8xf32>
    %277 = math.exp %276 : vector<6x8x8xf32>
    %cst_108 = arith.constant dense<0.000000e+00> : vector<6x8xf32>
    %278 = vector.multi_reduction <add>, %277, %cst_108 [2] : vector<6x8x8xf32> to vector<6x8xf32>
    %279 = vector.shape_cast %278 : vector<6x8xf32> to vector<6x8x1xf32>
    %280 = tpu.reciprocal %279 {approx = true} : vector<6x8x1xf32> -> vector<6x8x1xf32>
    %281 = vector.broadcast %280 : vector<6x8x1xf32> to vector<6x8x8xf32>
    %282 = arith.mulf %277, %281 : vector<6x8x8xf32>
    "tpu.trace_start"() <{level = 10 : i32, message = "bqk,bkd->bqd"}> : () -> ()
    %cst_109 = arith.constant dense<0.000000e+00> : vector<6x8x16xf32>
    %283 = tpu.matmul %282, %266, %cst_109 {dimension_numbers = #tpu.dot_dimension_numbers<[2], [1], [1], [2], [0, 0, 0, 1, 1, 2], [0], [0]>} : vector<6x8x8xf32>, vector<6x8x16xf32>, vector<6x8x16xf32> -> vector<6x8x16xf32>
    "tpu.trace_stop"() : () -> ()
    %284 = vector.extract_strided_slice %247 {offsets = [0, 0, 16], sizes = [6, 8, 16], strides = [1, 1, 1]} : vector<6x8x32xf32> to vector<6x8x16xf32>
    %285 = vector.extract_strided_slice %255 {offsets = [0, 0, 16], sizes = [6, 8, 16], strides = [1, 1, 1]} : vector<6x8x32xf32> to vector<6x8x16xf32>
    %286 = vector.extract_strided_slice %263 {offsets = [0, 0, 16], sizes = [6, 8, 16], strides = [1, 1, 1]} : vector<6x8x32xf32> to vector<6x8x16xf32>
    "tpu.trace_start"() <{level = 10 : i32, message = "bqd,bkd->bqk"}> : () -> ()
    %cst_110 = arith.constant dense<0.000000e+00> : vector<6x8x8xf32>
    %287 = tpu.matmul %284, %285, %cst_110 {dimension_numbers = #tpu.dot_dimension_numbers<[2], [2], [1], [1], [0, 0, 0, 1, 1, 1], [0], [0]>} : vector<6x8x16xf32>, vector<6x8x16xf32>, vector<6x8x8xf32> -> vector<6x8x8xf32>
    "tpu.trace_stop"() : () -> ()
    %cst_111 = arith.constant 2.500000e-01 : f32
    %288 = vector.broadcast %cst_111 : f32 to vector<6x8x8xf32>
    %289 = arith.mulf %287, %288 : vector<6x8x8xf32>
    %290 = vector.shape_cast %25 : vector<6x8xf32> to vector<6x1x8xf32>
    %291 = vector.broadcast %290 : vector<6x1x8xf32> to vector<6x8x8xf32>
    %292 = arith.addf %289, %291 : vector<6x8x8xf32>
    %cst_112 = arith.constant dense<0xFF800000> : vector<6x8xf32>
    %293 = vector.multi_reduction <maximumf>, %292, %cst_112 [2] : vector<6x8x8xf32> to vector<6x8xf32>
    %294 = vector.shape_cast %293 : vector<6x8xf32> to vector<6x8x1xf32>
    %295 = vector.broadcast %294 : vector<6x8x1xf32> to vector<6x8x8xf32>
    %296 = arith.subf %292, %295 : vector<6x8x8xf32>
    %297 = math.exp %296 : vector<6x8x8xf32>
    %cst_113 = arith.constant dense<0.000000e+00> : vector<6x8xf32>
    %298 = vector.multi_reduction <add>, %297, %cst_113 [2] : vector<6x8x8xf32> to vector<6x8xf32>
    %299 = vector.shape_cast %298 : vector<6x8xf32> to vector<6x8x1xf32>
    %300 = tpu.reciprocal %299 {approx = true} : vector<6x8x1xf32> -> vector<6x8x1xf32>
    %301 = vector.broadcast %300 : vector<6x8x1xf32> to vector<6x8x8xf32>
    %302 = arith.mulf %297, %301 : vector<6x8x8xf32>
    "tpu.trace_start"() <{level = 10 : i32, message = "bqk,bkd->bqd"}> : () -> ()
    %cst_114 = arith.constant dense<0.000000e+00> : vector<6x8x16xf32>
    %303 = tpu.matmul %302, %286, %cst_114 {dimension_numbers = #tpu.dot_dimension_numbers<[2], [1], [1], [2], [0, 0, 0, 1, 1, 2], [0], [0]>} : vector<6x8x8xf32>, vector<6x8x16xf32>, vector<6x8x16xf32> -> vector<6x8x16xf32>
    "tpu.trace_stop"() : () -> ()
    %304 = tpu.concatenate %283, %303 in 2 : vector<6x8x16xf32>, vector<6x8x16xf32> -> vector<6x8x32xf32>
    %305 = vector.extract_strided_slice %70 {offsets = [0, 1, 0, 0], sizes = [6, 1, 32, 32], strides = [1, 1, 1, 1]} : vector<6x2x32x32xf32> to vector<6x1x32x32xf32>
    %306 = vector.shape_cast %305 : vector<6x1x32x32xf32> to vector<6x32x32xf32>
    "tpu.trace_start"() <{level = 10 : i32, message = "bsd,bde->bse"}> : () -> ()
    %cst_115 = arith.constant dense<0.000000e+00> : vector<6x8x32xf32>
    %307 = tpu.matmul %304, %306, %cst_115 {dimension_numbers = #tpu.dot_dimension_numbers<[2], [1], [1], [2], [0, 0, 0, 1, 1, 2], [0], [0]>} : vector<6x8x32xf32>, vector<6x32x32xf32>, vector<6x8x32xf32> -> vector<6x8x32xf32>
    "tpu.trace_stop"() : () -> ()
    %308 = vector.extract_strided_slice %71 {offsets = [0, 1, 0], sizes = [6, 1, 32], strides = [1, 1, 1]} : vector<6x2x32xf32> to vector<6x1x32xf32>
    %309 = vector.shape_cast %308 : vector<6x1x32xf32> to vector<6x32xf32>
    %310 = vector.shape_cast %309 : vector<6x32xf32> to vector<6x1x32xf32>
    %311 = vector.broadcast %310 : vector<6x1x32xf32> to vector<6x8x32xf32>
    %312 = arith.addf %307, %311 : vector<6x8x32xf32>
    %313 = arith.addf %312, %239 : vector<6x8x32xf32>
    %314 = vector.extract_strided_slice %72 {offsets = [0, 1, 0], sizes = [6, 1, 32], strides = [1, 1, 1]} : vector<6x2x32xf32> to vector<6x1x32xf32>
    %315 = vector.shape_cast %314 : vector<6x1x32xf32> to vector<6x32xf32>
    %316 = vector.shape_cast %315 : vector<6x32xf32> to vector<6x1x32xf32>
    %317 = vector.extract_strided_slice %73 {offsets = [0, 1, 0], sizes = [6, 1, 32], strides = [1, 1, 1]} : vector<6x2x32xf32> to vector<6x1x32xf32>
    %318 = vector.shape_cast %317 : vector<6x1x32xf32> to vector<6x32xf32>
    %319 = vector.shape_cast %318 : vector<6x32xf32> to vector<6x1x32xf32>
    %cst_116 = arith.constant dense<0.000000e+00> : vector<6x8xf32>
    %320 = vector.multi_reduction <add>, %313, %cst_116 [2] : vector<6x8x32xf32> to vector<6x8xf32>
    %321 = vector.shape_cast %320 : vector<6x8xf32> to vector<6x8x1xf32>
    %cst_117 = arith.constant 3.200000e+01 : f32
    %322 = vector.broadcast %cst_117 : f32 to vector<6x8x1xf32>
    %323 = arith.divf %321, %322 : vector<6x8x1xf32>
    %324 = vector.broadcast %323 : vector<6x8x1xf32> to vector<6x8x32xf32>
    %325 = arith.subf %313, %324 : vector<6x8x32xf32>
    %326 = arith.mulf %325, %325 : vector<6x8x32xf32>
    %cst_118 = arith.constant dense<0.000000e+00> : vector<6x8xf32>
    %327 = vector.multi_reduction <add>, %326, %cst_118 [2] : vector<6x8x32xf32> to vector<6x8xf32>
    %328 = vector.shape_cast %327 : vector<6x8xf32> to vector<6x8x1xf32>
    %cst_119 = arith.constant 3.200000e+01 : f32
    %329 = vector.broadcast %cst_119 : f32 to vector<6x8x1xf32>
    %330 = arith.divf %328, %329 : vector<6x8x1xf32>
    %331 = vector.broadcast %323 : vector<6x8x1xf32> to vector<6x8x32xf32>
    %332 = arith.subf %313, %331 : vector<6x8x32xf32>
    %cst_120 = arith.constant 9.99999996E-13 : f32
    %333 = vector.broadcast %cst_120 : f32 to vector<6x8x1xf32>
    %334 = arith.addf %330, %333 : vector<6x8x1xf32>
    %335 = math.rsqrt %334 : vector<6x8x1xf32>
    %336 = vector.broadcast %335 : vector<6x8x1xf32> to vector<6x8x32xf32>
    %337 = arith.mulf %332, %336 : vector<6x8x32xf32>
    %338 = vector.broadcast %316 : vector<6x1x32xf32> to vector<6x8x32xf32>
    %339 = arith.mulf %337, %338 : vector<6x8x32xf32>
    %340 = vector.broadcast %319 : vector<6x1x32xf32> to vector<6x8x32xf32>
    %341 = arith.addf %339, %340 : vector<6x8x32xf32>
    %342 = vector.extract_strided_slice %74 {offsets = [0, 1, 0, 0], sizes = [6, 1, 32, 128], strides = [1, 1, 1, 1]} : vector<6x2x32x128xf32> to vector<6x1x32x128xf32>
    %343 = vector.shape_cast %342 : vector<6x1x32x128xf32> to vector<6x32x128xf32>
    "tpu.trace_start"() <{level = 10 : i32, message = "bsd,bdf->bsf"}> : () -> ()
    %cst_121 = arith.constant dense<0.000000e+00> : vector<6x8x128xf32>
    %344 = tpu.matmul %341, %343, %cst_121 {dimension_numbers = #tpu.dot_dimension_numbers<[2], [1], [1], [2], [0, 0, 0, 1, 1, 2], [0], [0]>} : vector<6x8x32xf32>, vector<6x32x128xf32>, vector<6x8x128xf32> -> vector<6x8x128xf32>
    "tpu.trace_stop"() : () -> ()
    %345 = vector.extract_strided_slice %75 {offsets = [0, 1, 0], sizes = [6, 1, 128], strides = [1, 1, 1]} : vector<6x2x128xf32> to vector<6x1x128xf32>
    %346 = vector.shape_cast %345 : vector<6x1x128xf32> to vector<6x128xf32>
    %347 = vector.shape_cast %346 : vector<6x128xf32> to vector<6x1x128xf32>
    %348 = vector.broadcast %347 : vector<6x1x128xf32> to vector<6x8x128xf32>
    %349 = arith.addf %344, %348 : vector<6x8x128xf32>
    %350 = arith.mulf %349, %349 : vector<6x8x128xf32>
    %351 = arith.mulf %349, %350 : vector<6x8x128xf32>
    %cst_122 = arith.constant 4.471500e-02 : f32
    %352 = vector.broadcast %cst_122 : f32 to vector<6x8x128xf32>
    %353 = arith.mulf %352, %351 : vector<6x8x128xf32>
    %354 = arith.addf %349, %353 : vector<6x8x128xf32>
    %cst_123 = arith.constant 0.797884583 : f32
    %355 = vector.broadcast %cst_123 : f32 to vector<6x8x128xf32>
    %356 = arith.mulf %355, %354 : vector<6x8x128xf32>
    %357 = math.tanh %356 : vector<6x8x128xf32>
    %cst_124 = arith.constant 1.000000e+00 : f32
    %358 = vector.broadcast %cst_124 : f32 to vector<6x8x128xf32>
    %359 = arith.addf %358, %357 : vector<6x8x128xf32>
    %cst_125 = arith.constant 5.000000e-01 : f32
    %360 = vector.broadcast %cst_125 : f32 to vector<6x8x128xf32>
    %361 = arith.mulf %360, %359 : vector<6x8x128xf32>
    %362 = arith.mulf %349, %361 : vector<6x8x128xf32>
    %363 = vector.extract_strided_slice %76 {offsets = [0, 1, 0, 0], sizes = [6, 1, 128, 32], strides = [1, 1, 1, 1]} : vector<6x2x128x32xf32> to vector<6x1x128x32xf32>
    %364 = vector.shape_cast %363 : vector<6x1x128x32xf32> to vector<6x128x32xf32>
    "tpu.trace_start"() <{level = 10 : i32, message = "bsf,bfd->bsd"}> : () -> ()
    %cst_126 = arith.constant dense<0.000000e+00> : vector<6x8x32xf32>
    %365 = tpu.matmul %362, %364, %cst_126 {dimension_numbers = #tpu.dot_dimension_numbers<[2], [1], [1], [2], [0, 0, 0, 1, 1, 2], [0], [0]>} : vector<6x8x128xf32>, vector<6x128x32xf32>, vector<6x8x32xf32> -> vector<6x8x32xf32>
    "tpu.trace_stop"() : () -> ()
    %366 = vector.extract_strided_slice %77 {offsets = [0, 1, 0], sizes = [6, 1, 32], strides = [1, 1, 1]} : vector<6x2x32xf32> to vector<6x1x32xf32>
    %367 = vector.shape_cast %366 : vector<6x1x32xf32> to vector<6x32xf32>
    %368 = vector.shape_cast %367 : vector<6x32xf32> to vector<6x1x32xf32>
    %369 = vector.broadcast %368 : vector<6x1x32xf32> to vector<6x8x32xf32>
    %370 = arith.addf %365, %369 : vector<6x8x32xf32>
    %371 = arith.addf %370, %341 : vector<6x8x32xf32>
    %372 = vector.extract_strided_slice %78 {offsets = [0, 1, 0], sizes = [6, 1, 32], strides = [1, 1, 1]} : vector<6x2x32xf32> to vector<6x1x32xf32>
    %373 = vector.shape_cast %372 : vector<6x1x32xf32> to vector<6x32xf32>
    %374 = vector.shape_cast %373 : vector<6x32xf32> to vector<6x1x32xf32>
    %375 = vector.extract_strided_slice %79 {offsets = [0, 1, 0], sizes = [6, 1, 32], strides = [1, 1, 1]} : vector<6x2x32xf32> to vector<6x1x32xf32>
    %376 = vector.shape_cast %375 : vector<6x1x32xf32> to vector<6x32xf32>
    %377 = vector.shape_cast %376 : vector<6x32xf32> to vector<6x1x32xf32>
    %cst_127 = arith.constant dense<0.000000e+00> : vector<6x8xf32>
    %378 = vector.multi_reduction <add>, %371, %cst_127 [2] : vector<6x8x32xf32> to vector<6x8xf32>
    %379 = vector.shape_cast %378 : vector<6x8xf32> to vector<6x8x1xf32>
    %cst_128 = arith.constant 3.200000e+01 : f32
    %380 = vector.broadcast %cst_128 : f32 to vector<6x8x1xf32>
    %381 = arith.divf %379, %380 : vector<6x8x1xf32>
    %382 = vector.broadcast %381 : vector<6x8x1xf32> to vector<6x8x32xf32>
    %383 = arith.subf %371, %382 : vector<6x8x32xf32>
    %384 = arith.mulf %383, %383 : vector<6x8x32xf32>
    %cst_129 = arith.constant dense<0.000000e+00> : vector<6x8xf32>
    %385 = vector.multi_reduction <add>, %384, %cst_129 [2] : vector<6x8x32xf32> to vector<6x8xf32>
    %386 = vector.shape_cast %385 : vector<6x8xf32> to vector<6x8x1xf32>
    %cst_130 = arith.constant 3.200000e+01 : f32
    %387 = vector.broadcast %cst_130 : f32 to vector<6x8x1xf32>
    %388 = arith.divf %386, %387 : vector<6x8x1xf32>
    %389 = vector.broadcast %381 : vector<6x8x1xf32> to vector<6x8x32xf32>
    %390 = arith.subf %371, %389 : vector<6x8x32xf32>
    %cst_131 = arith.constant 9.99999996E-13 : f32
    %391 = vector.broadcast %cst_131 : f32 to vector<6x8x1xf32>
    %392 = arith.addf %388, %391 : vector<6x8x1xf32>
    %393 = math.rsqrt %392 : vector<6x8x1xf32>
    %394 = vector.broadcast %393 : vector<6x8x1xf32> to vector<6x8x32xf32>
    %395 = arith.mulf %390, %394 : vector<6x8x32xf32>
    %396 = vector.broadcast %374 : vector<6x1x32xf32> to vector<6x8x32xf32>
    %397 = arith.mulf %395, %396 : vector<6x8x32xf32>
    %398 = vector.broadcast %377 : vector<6x1x32xf32> to vector<6x8x32xf32>
    %399 = arith.addf %397, %398 : vector<6x8x32xf32>
    %400 = vector.extract_strided_slice %399 {offsets = [0, 7, 0], sizes = [2, 1, 32], strides = [1, 1, 1]} : vector<6x8x32xf32> to vector<2x1x32xf32>
    %401 = vector.shape_cast %400 : vector<2x1x32xf32> to vector<2x32xf32>
    %c0_132 = arith.constant 0 : index
    %c0_133 = arith.constant 0 : index
    %402 = vector.load %arg22[%c0_132, %c0_133] : memref<32x32xf32, #tpu.memory_space<vmem>>, vector<32x32xf32>
    %cst_134 = arith.constant dense<0.000000e+00> : vector<2x32xf32>
    %403 = tpu.matmul %401, %402, %cst_134 {dimension_numbers = #tpu.dot_dimension_numbers<[1], [0], [0], [1], [0, 0, 1, 1], [], []>} : vector<2x32xf32>, vector<32x32xf32>, vector<2x32xf32> -> vector<2x32xf32>
    %c0_135 = arith.constant 0 : index
    %c0_136 = arith.constant 0 : index
    %404 = vector.load %arg23[%c0_135, %c0_136] : memref<1x32xf32, #tpu.memory_space<vmem>>, vector<1x32xf32>
    %405 = vector.shape_cast %404 : vector<1x32xf32> to vector<32xf32>
    %406 = vector.shape_cast %405 : vector<32xf32> to vector<1x32xf32>
    %407 = vector.broadcast %406 : vector<1x32xf32> to vector<2x32xf32>
    %408 = arith.addf %403, %407 : vector<2x32xf32>
    %409 = vector.extract_strided_slice %19 {offsets = [0, 0], sizes = [2, 32], strides = [1, 1]} : vector<4x32xf32> to vector<2x32xf32>
    %410 = arith.mulf %408, %409 : vector<2x32xf32>
    %411 = arith.negf %410 : vector<2x32xf32>
    %412 = math.exp %411 : vector<2x32xf32>
    %cst_137 = arith.constant 1.000000e+00 : f32
    %413 = vector.broadcast %cst_137 : f32 to vector<2x32xf32>
    %414 = arith.addf %413, %412 : vector<2x32xf32>
    %415 = arith.divf %413, %414 : vector<2x32xf32>
    %416 = vector.extract_strided_slice %19 {offsets = [2, 0], sizes = [2, 32], strides = [1, 1]} : vector<4x32xf32> to vector<2x32xf32>
    %417 = arith.mulf %408, %416 : vector<2x32xf32>
    %418 = arith.negf %417 : vector<2x32xf32>
    %419 = math.exp %418 : vector<2x32xf32>
    %cst_138 = arith.constant 1.000000e+00 : f32
    %420 = vector.broadcast %cst_138 : f32 to vector<2x32xf32>
    %421 = arith.addf %420, %419 : vector<2x32xf32>
    %422 = arith.divf %420, %421 : vector<2x32xf32>
    %423 = arith.subf %415, %422 : vector<2x32xf32>
    %cst_139 = arith.constant 0.000000e+00 : f32
    %424 = vector.broadcast %cst_139 : f32 to vector<2x32xf32>
    %425 = arith.subf %424, %423 : vector<2x32xf32>
    %426 = math.exp %425 : vector<2x32xf32>
    %cst_140 = arith.constant 1.000000e+00 : f32
    %427 = vector.broadcast %cst_140 : f32 to vector<2x32xf32>
    %428 = arith.addf %427, %426 : vector<2x32xf32>
    %429 = math.log %428 : vector<2x32xf32>
    %430 = vector.shape_cast %429 : vector<2x32xf32> to vector<1x2x32xf32>
    %cst_141 = arith.constant dense<0.000000e+00> : vector<1xf32>
    %431 = vector.multi_reduction <add>, %430, %cst_141 [1, 2] : vector<1x2x32xf32> to vector<1xf32>
    %432 = vector.shape_cast %431 : vector<1xf32> to vector<1x1x1xf32>
    %433 = vector.extract %432[0, 0, 0] : f32 from vector<1x1x1xf32>
    %cst_142 = arith.constant 6.400000e+01 : f32
    %434 = arith.divf %433, %cst_142 : f32
    %c0_143 = arith.constant 0 : index
    %c0_144 = arith.constant 0 : index
    %435 = memref.load %arg24[%c0_143, %c0_144] : memref<1x1xf32, #tpu.memory_space<smem>>
    memref.store %434, %arg24[%c0_143, %c0_144] : memref<1x1xf32, #tpu.memory_space<smem>>
    return
  }
}

</mosaic_0001>

<llo_original>
// kernel: model_gen_forward.1
$region0: #{model_gen_forward.1}
  #allocation0 [shape = 'u32[]', space=smem, size = 0x4, offset = 0x4, fixed_abs, tag = 'smem constant byte address 0x4 - core index']
  #allocation1 [shape = 'u32[72,128]{1,0:T(1,128)}', space=vmem, size = 0x9000, scoped, tag = 'internal scratch']
  %s0 = inlined_call_operand.vmem [shape: s32[6,8], index: 0, kind: input, shape index: {}]
  %s1 = inlined_call_operand.vmem [shape: s32[2,2], index: 1, kind: input, shape index: {}]
  %s2 = inlined_call_operand.vmem [shape: f32[64,32], index: 2, kind: input, shape index: {}]
  %s3 = inlined_call_operand.vmem [shape: f32[8,32], index: 3, kind: input, shape index: {}]
  %s4 = inlined_call_operand.vmem [shape: f32[1,32], index: 4, kind: input, shape index: {}]
  %s5 = inlined_call_operand.vmem [shape: f32[1,32], index: 5, kind: input, shape index: {}]
  %s6 = inlined_call_operand.vmem [shape: f32[6,2,32,32], index: 6, kind: input, shape index: {}]
  %s7 = inlined_call_operand.vmem [shape: f32[6,2,32], index: 7, kind: input, shape index: {}]
  %s8 = inlined_call_operand.vmem [shape: f32[6,2,32,32], index: 8, kind: input, shape index: {}]
  %s9 = inlined_call_operand.vmem [shape: f32[6,2,32], index: 9, kind: input, shape index: {}]
  %s10 = inlined_call_operand.vmem [shape: f32[6,2,32,32], index: 10, kind: input, shape index: {}]
  %s11 = inlined_call_operand.vmem [shape: f32[6,2,32], index: 11, kind: input, shape index: {}]
  %s12 = inlined_call_operand.vmem [shape: f32[6,2,32,32], index: 12, kind: input, shape index: {}]
  %s13 = inlined_call_operand.vmem [shape: f32[6,2,32], index: 13, kind: input, shape index: {}]
  %s14 = inlined_call_operand.vmem [shape: f32[6,2,32], index: 14, kind: input, shape index: {}]
  %s15 = inlined_call_operand.vmem [shape: f32[6,2,32], index: 15, kind: input, shape index: {}]
  %s16 = inlined_call_operand.vmem [shape: f32[6,2,32,128], index: 16, kind: input, shape index: {}]
  %s17 = inlined_call_operand.vmem [shape: f32[6,2,128], index: 17, kind: input, shape index: {}]
  %s18 = inlined_call_operand.vmem [shape: f32[6,2,128,32], index: 18, kind: input, shape index: {}]
  %s19 = inlined_call_operand.vmem [shape: f32[6,2,32], index: 19, kind: input, shape index: {}]
  %s20 = inlined_call_operand.vmem [shape: f32[6,2,32], index: 20, kind: input, shape index: {}]
  %s21 = inlined_call_operand.vmem [shape: f32[6,2,32], index: 21, kind: input, shape index: {}]
  %s22 = inlined_call_operand.vmem [shape: f32[32,32], index: 22, kind: input, shape index: {}]
  %s23 = inlined_call_operand.vmem [shape: f32[1,32], index: 23, kind: input, shape index: {}]
  %s24 = inlined_call_operand.hbm [shape: f32[1,1], index: 24, kind: output, shape index: {}]
  %s25 = sld [smem:[#allocation0]]
  $region106: #{model_gen_forward.1} parent=0
    _
  %s27 = ssub.s32 1, %s25
  %s28 = scalar_select 0, %s27, %s25
  $region1: #{model_gen_forward.1} parent=0
    #allocation2 [shape = 'u8[512]{0}', space=smem, size = 0x200, scoped, tag = 'output window, operand 0, single buffered']
    #allocation3 [shape = 's32[1]{0}', space=sflag, size = 0x4, scoped, tag = 'scoped memory for model_gen_forward.1']
    %29 = vsyncpa [#allocation3], 0
    // Predicated region
    $region2: #{model_gen_forward.1} parent=1 // pred_check
      _
    $region3: #{model_gen_forward.1} parent=1 // pred_check_branch
      %31 = sbr.rel (0) target = $region5
    $region4: #{model_gen_forward.1} parent=1 // pred_region
      _
    $region5: #{model_gen_forward.1} parent=1 // pred_fallthru
      _
    // Predicated region
    $region6: #{model_gen_forward.1} parent=1 // pred_check
      _
    $region7: #{model_gen_forward.1} parent=1 // pred_check_branch
      %33 = sbr.rel (0) target = $region9
    $region8: #{model_gen_forward.1} parent=1 // pred_region
      _
    $region9: #{model_gen_forward.1} parent=1 // pred_fallthru
      _
    // Predicated region
    $region10: #{model_gen_forward.1} parent=1 // pred_check
      _
    $region11: #{model_gen_forward.1} parent=1 // pred_check_branch
      %35 = sbr.rel (0) target = $region13
    $region12: #{model_gen_forward.1} parent=1 // pred_region
      _
    $region13: #{model_gen_forward.1} parent=1 // pred_fallthru
      _
    // Predicated region
    $region14: #{model_gen_forward.1} parent=1 // pred_check
      _
    $region15: #{model_gen_forward.1} parent=1 // pred_check_branch
      %37 = sbr.rel (0) target = $region17
    $region16: #{model_gen_forward.1} parent=1 // pred_region
      _
    $region17: #{model_gen_forward.1} parent=1 // pred_fallthru
      _
    // Predicated region
    $region18: #{model_gen_forward.1} parent=1 // pred_check
      _
    $region19: #{model_gen_forward.1} parent=1 // pred_check_branch
      %39 = sbr.rel (0) target = $region21
    $region20: #{model_gen_forward.1} parent=1 // pred_region
      _
    $region21: #{model_gen_forward.1} parent=1 // pred_fallthru
      _
    // Predicated region
    $region22: #{model_gen_forward.1} parent=1 // pred_check
      _
    $region23: #{model_gen_forward.1} parent=1 // pred_check_branch
      %41 = sbr.rel (0) target = $region25
    $region24: #{model_gen_forward.1} parent=1 // pred_region
      _
    $region25: #{model_gen_forward.1} parent=1 // pred_fallthru
      _
    // Predicated region
    $region26: #{model_gen_forward.1} parent=1 // pred_check
      _
    $region27: #{model_gen_forward.1} parent=1 // pred_check_branch
      %43 = sbr.rel (0) target = $region29
    $region28: #{model_gen_forward.1} parent=1 // pred_region
      _
    $region29: #{model_gen_forward.1} parent=1 // pred_fallthru
      _
    // Predicated region
    $region30: #{model_gen_forward.1} parent=1 // pred_check
      _
    $region31: #{model_gen_forward.1} parent=1 // pred_check_branch
      %45 = sbr.rel (0) target = $region33
    $region32: #{model_gen_forward.1} parent=1 // pred_region
      _
    $region33: #{model_gen_forward.1} parent=1 // pred_fallthru
      _
    // Predicated region
    $region34: #{model_gen_forward.1} parent=1 // pred_check
      _
    $region35: #{model_gen_forward.1} parent=1 // pred_check_branch
      %47 = sbr.rel (0) target = $region37
    $region36: #{model_gen_forward.1} parent=1 // pred_region
      _
    $region37: #{model_gen_forward.1} parent=1 // pred_fallthru
      _
    // Predicated region
    $region38: #{model_gen_forward.1} parent=1 // pred_check
      _
    $region39: #{model_gen_forward.1} parent=1 // pred_check_branch
      %49 = sbr.rel (0) target = $region41
    $region40: #{model_gen_forward.1} parent=1 // pred_region
      _
    $region41: #{model_gen_forward.1} parent=1 // pred_fallthru
      _
    // Predicated region
    $region42: #{model_gen_forward.1} parent=1 // pred_check
      _
    $region43: #{model_gen_forward.1} parent=1 // pred_check_branch
      %51 = sbr.rel (0) target = $region45
    $region44: #{model_gen_forward.1} parent=1 // pred_region
      _
    $region45: #{model_gen_forward.1} parent=1 // pred_fallthru
      _
    // Predicated region
    $region46: #{model_gen_forward.1} parent=1 // pred_check
      _
    $region47: #{model_gen_forward.1} parent=1 // pred_check_branch
      %53 = sbr.rel (0) target = $region49
    $region48: #{model_gen_forward.1} parent=1 // pred_region
      _
    $region49: #{model_gen_forward.1} parent=1 // pred_fallthru
      _
    // Predicated region
    $region50: #{model_gen_forward.1} parent=1 // pred_check
      _
    $region51: #{model_gen_forward.1} parent=1 // pred_check_branch
      %55 = sbr.rel (0) target = $region53
    $region52: #{model_gen_forward.1} parent=1 // pred_region
      _
    $region53: #{model_gen_forward.1} parent=1 // pred_fallthru
      _
    // Predicated region
    $region54: #{model_gen_forward.1} parent=1 // pred_check
      _
    $region55: #{model_gen_forward.1} parent=1 // pred_check_branch
      %57 = sbr.rel (0) target = $region57
    $region56: #{model_gen_forward.1} parent=1 // pred_region
      _
    $region57: #{model_gen_forward.1} parent=1 // pred_fallthru
      _
    // Predicated region
    $region58: #{model_gen_forward.1} parent=1 // pred_check
      _
    $region59: #{model_gen_forward.1} parent=1 // pred_check_branch
      %59 = sbr.rel (0) target = $region61
    $region60: #{model_gen_forward.1} parent=1 // pred_region
      _
    $region61: #{model_gen_forward.1} parent=1 // pred_fallthru
      _
    // Predicated region
    $region62: #{model_gen_forward.1} parent=1 // pred_check
      _
    $region63: #{model_gen_forward.1} parent=1 // pred_check_branch
      %61 = sbr.rel (0) target = $region65
    $region64: #{model_gen_forward.1} parent=1 // pred_region
      _
    $region65: #{model_gen_forward.1} parent=1 // pred_fallthru
      _
    // Predicated region
    $region66: #{model_gen_forward.1} parent=1 // pred_check
      _
    $region67: #{model_gen_forward.1} parent=1 // pred_check_branch
      %63 = sbr.rel (0) target = $region69
    $region68: #{model_gen_forward.1} parent=1 // pred_region
      _
    $region69: #{model_gen_forward.1} parent=1 // pred_fallthru
      _
    // Predicated region
    $region70: #{model_gen_forward.1} parent=1 // pred_check
      _
    $region71: #{model_gen_forward.1} parent=1 // pred_check_branch
      %65 = sbr.rel (0) target = $region73
    $region72: #{model_gen_forward.1} parent=1 // pred_region
      _
    $region73: #{model_gen_forward.1} parent=1 // pred_fallthru
      _
    // Predicated region
    $region74: #{model_gen_forward.1} parent=1 // pred_check
      _
    $region75: #{model_gen_forward.1} parent=1 // pred_check_branch
      %67 = sbr.rel (0) target = $region77
    $region76: #{model_gen_forward.1} parent=1 // pred_region
      _
    $region77: #{model_gen_forward.1} parent=1 // pred_fallthru
      _
    // Predicated region
    $region78: #{model_gen_forward.1} parent=1 // pred_check
      _
    $region79: #{model_gen_forward.1} parent=1 // pred_check_branch
      %69 = sbr.rel (0) target = $region81
    $region80: #{model_gen_forward.1} parent=1 // pred_region
      _
    $region81: #{model_gen_forward.1} parent=1 // pred_fallthru
      _
    // Predicated region
    $region82: #{model_gen_forward.1} parent=1 // pred_check
      _
    $region83: #{model_gen_forward.1} parent=1 // pred_check_branch
      %71 = sbr.rel (0) target = $region85
    $region84: #{model_gen_forward.1} parent=1 // pred_region
      _
    $region85: #{model_gen_forward.1} parent=1 // pred_fallthru
      _
    // Predicated region
    $region86: #{model_gen_forward.1} parent=1 // pred_check
      _
    $region87: #{model_gen_forward.1} parent=1 // pred_check_branch
      %73 = sbr.rel (0) target = $region89
    $region88: #{model_gen_forward.1} parent=1 // pred_region
      _
    $region89: #{model_gen_forward.1} parent=1 // pred_fallthru
      _
    // Predicated region
    $region90: #{model_gen_forward.1} parent=1 // pred_check
      _
    $region91: #{model_gen_forward.1} parent=1 // pred_check_branch
      %75 = sbr.rel (0) target = $region93
    $region92: #{model_gen_forward.1} parent=1 // pred_region
      _
    $region93: #{model_gen_forward.1} parent=1 // pred_fallthru
      _
    // Predicated region
    $region94: #{model_gen_forward.1} parent=1 // pred_check
      _
    $region95: #{model_gen_forward.1} parent=1 // pred_check_branch
      %77 = sbr.rel (0) target = $region97
    $region96: #{model_gen_forward.1} parent=1 // pred_region
      _
    $region97: #{model_gen_forward.1} parent=1 // pred_fallthru
      _
    %v78 = vld [vmem:[%s2] sm:$0xff]
    %v79 = vld [vmem:[%s2 + $0x8] sm:$0xff]
    %v80 = vld [vmem:[%s2 + $0x10] sm:$0xff]
    %v81 = vld [vmem:[%s2 + $0x18] sm:$0xff]
    %v82 = vld [vmem:[%s2 + $0x20] sm:$0xff]
    %v83 = vld [vmem:[%s2 + $0x28] sm:$0xff]
    %v84 = vld [vmem:[%s2 + $0x30] sm:$0xff]
    %v85 = vld [vmem:[%s2 + $0x38] sm:$0xff]
    %v86 = vld [vmem:[%s0] sm:$0x3f]
    %v87 = vlaneseq
    %v88 = vand.u32 %v87, 127
    %v89 = vperm.slane %v86, 0
    %v90 = vlaneseq
    %v91 = vshrl.u32 %v90, 7
    %93 = vset.pattern.permute.xlu0 %v91
    %94 = vperm.xlu0 %93, %v89
    %v95 = vpop.permute.xlu0 %94
    %v96 = vperm.slane %v86, 1
    %v97 = vlaneseq
    %v98 = vshrl.u32 %v97, 7
    %100 = vset.pattern.permute.xlu0 %v98
    %101 = vperm.xlu0 %100, %v96
    %v102 = vpop.permute.xlu0 %101
    %v103 = vperm.slane %v86, 2
    %v104 = vlaneseq
    %v105 = vshrl.u32 %v104, 7
    %107 = vset.pattern.permute.xlu0 %v105
    %108 = vperm.xlu0 %107, %v103
    %v109 = vpop.permute.xlu0 %108
    %v110 = vperm.slane %v86, 3
    %v111 = vlaneseq
    %v112 = vshrl.u32 %v111, 7
    %114 = vset.pattern.permute.xlu0 %v112
    %115 = vperm.xlu0 %114, %v110
    %v116 = vpop.permute.xlu0 %115
    %v117 = vperm.slane %v86, 4
    %v118 = vlaneseq
    %v119 = vshrl.u32 %v118, 7
    %121 = vset.pattern.permute.xlu0 %v119
    %122 = vperm.xlu0 %121, %v117
    %v123 = vpop.permute.xlu0 %122
    %v124 = vperm.slane %v86, 5
    %v125 = vlaneseq
    %v126 = vshrl.u32 %v125, 7
    %128 = vset.pattern.permute.xlu0 %v126
    %129 = vperm.xlu0 %128, %v124
    %v130 = vpop.permute.xlu0 %129
    %vm131 = vcmp.eq.s32.totalorder %v95, %v88
    %vm132 = vcmp.eq.s32.totalorder %v102, %v88
    %vm133 = vcmp.eq.s32.totalorder %v109, %v88
    %vm134 = vcmp.eq.s32.totalorder %v116, %v88
    %vm135 = vcmp.eq.s32.totalorder %v123, %v88
    %vm136 = vcmp.eq.s32.totalorder %v130, %v88
    %v137 = vsel %vm131, 1, 0
    %v138 = vsel %vm132, 1, 0
    %v139 = vsel %vm133, 1, 0
    %v140 = vsel %vm134, 1, 0
    %v141 = vsel %vm135, 1, 0
    %v142 = vsel %vm136, 1, 0
    %v143 = vcvt.s32.f32 %v137
    %v144 = vcvt.s32.f32 %v138
    %v145 = vcvt.s32.f32 %v139
    %v146 = vcvt.s32.f32 %v140
    %v147 = vcvt.s32.f32 %v141
    %v148 = vcvt.s32.f32 %v142
    %vm149 = vcmask 523264
    %v151 = vsel %vm149, %v143, 0
    %v154 = vsel %vm149, %v144, 0
    %v157 = vsel %vm149, %v145, 0
    %v160 = vsel %vm149, %v146, 0
    %v163 = vsel %vm149, %v147, 0
    %v166 = vsel %vm149, %v148, 0
    %168 = vmatpush.msra.mxu0 0.0
    %169 = vmatpush.msra.mxu0 0.0
    %170 = vmatpush.msra.mxu0 0.0
    %171 = vmatpush.msra.mxu0 0.0
    %172 = vmatpush.msra.mxu0 0.0
    %173 = vmatpush.msra.mxu0 0.0
    %174 = vmatpush.msra.mxu0 0.0
    %175 = vmatpush.msra.mxu0 0.0
    %176 = vmatpush.msra.mxu0 %v85
    %177 = vmatpush.msra.mxu0 %v84
    %178 = vmatpush.msra.mxu0 %v83
    %179 = vmatpush.msra.mxu0 %v82
    %180 = vmatpush.msra.mxu0 %v81
    %181 = vmatpush.msra.mxu0 %v80
    %182 = vmatpush.msra.mxu0 %v79
    %183 = vmatpush.msra.mxu0 %v78
    %184 = vmatmul.f32.gmra.mxu0 %v151
    %v185 = vpop.f32.mrf.mxu0
    %v186 = vadd.f32 0.0, %v185
    %187 = vmatmul.f32.gmra.mxu0 %v154
    %v188 = vpop.f32.mrf.mxu0
    %v189 = vadd.f32 0.0, %v188
    %190 = vmatmul.f32.gmra.mxu0 %v157
    %v191 = vpop.f32.mrf.mxu0
    %192 = vmatmul.f32.gmra.mxu0 %v160
    %v193 = vpop.f32.mrf.mxu0
    %194 = vmatmul.f32.gmra.mxu0 %v163
    %v195 = vpop.f32.mrf.mxu0
    %196 = vmatmul.f32.gmra.mxu0 %v166
    %v197 = vpop.f32.mrf.mxu0
    %198 = vdwg.mxu0
    %v199 = vld [vmem:[%s1] sm:$0x3]
    %v200 = vperm.slane %v199, 0
    %v201 = vlaneseq
    %v202 = vshrl.u32 %v201, 7
    %204 = vset.pattern.permute.xlu0 %v202
    %205 = vperm.xlu0 %204, %v200
    %v206 = vpop.permute.xlu0 %205
    %v207 = vperm.slane %v199, 1
    %v208 = vlaneseq
    %v209 = vshrl.u32 %v208, 7
    %211 = vset.pattern.permute.xlu0 %v209
    %212 = vperm.xlu0 %211, %v207
    %v213 = vpop.permute.xlu0 %212
    %vm214 = vcmp.eq.s32.totalorder %v206, %v88
    %vm215 = vcmp.eq.s32.totalorder %v213, %v88
    %v216 = vsel %vm214, 1, 0
    %v217 = vsel %vm215, 1, 0
    %v218 = vcvt.s32.f32 %v216
    %v219 = vcvt.s32.f32 %v217
    %222 = vst [vmem:[#allocation1] ss:$4 sm:$0xff] %v218
    %s223 = scalar_lea.vmem [#allocation1], 1
    %224 = vst [vmem:[%s223] ss:$4 sm:$0xff] %v219
    %v225 = vld.sshfl [vmem:[#allocation1] sm:$0xff pattern:$0x73625140]
    %v226 = vsel %vm149, %v225, 0
    %228 = vmatpush.msra.mxu0 0.0
    %229 = vmatpush.msra.mxu0 0.0
    %230 = vmatpush.msra.mxu0 0.0
    %231 = vmatpush.msra.mxu0 0.0
    %232 = vmatpush.msra.mxu0 0.0
    %233 = vmatpush.msra.mxu0 0.0
    %234 = vmatpush.msra.mxu0 0.0
    %235 = vmatpush.msra.mxu0 0.0
    %236 = vmatpush.msra.mxu0 %v85
    %237 = vmatpush.msra.mxu0 %v84
    %238 = vmatpush.msra.mxu0 %v83
    %239 = vmatpush.msra.mxu0 %v82
    %240 = vmatpush.msra.mxu0 %v81
    %241 = vmatpush.msra.mxu0 %v80
    %242 = vmatpush.msra.mxu0 %v79
    %243 = vmatpush.msra.mxu0 %v78
    %244 = vmatmul.f32.gmra.mxu0 %v226
    %v245 = vpop.f32.mrf.mxu0
    %v246 = vadd.f32 0.0, %v245
    %247 = vdwg.mxu0
    %vm248 = vcmp.eq.s32.totalorder %v86, 0
    %v249 = vsel %vm248, 1, 0
    %v250 = vcvt.s32.f32 %v249
    %v251 = vmul.f32 %v250, -1e+08
    %v252 = vld [vmem:[%s3] sm:$0xff]
    %v253 = vadd.f32 %v186, %v252
    %v254 = vadd.f32 %v189, %v252
    %v255 = vld [vmem:[%s4] sm:$0x1]
    %v256 = vld [vmem:[%s5] sm:$0x1]
    %vm257 = vcmask 261120
    %v258 = vsel %vm257, %v253, 0.0
    %259 = vadd.xlane.f32.xlu0 %v258
    %v260 = vpop.xlane.xlu0 %259
    %v261 = vsel %vm257, %v254, 0.0
    %262 = vadd.xlane.f32.xlu0 %v261
    %v263 = vpop.xlane.xlu0 %262
    %v264 = vrcp.pop 32.0
    %v265 = vmul.f32 32.0, %v264
    %v266 = vsub.f32 1.0, %v265
    %v267 = vmul.f32 %v264, %v266
    %v268 = vadd.f32 %v264, %v267
    %vm269 = vweird.f32 %v264
    %v270 = vsel %vm269, %v264, %v268
    %v271 = vmul.f32 %v260, %v270
    %v272 = vmul.f32 %v263, %v270
    %v273 = vsub.f32 %v253, %v271
    %v274 = vsub.f32 %v254, %v272
    %v275 = vmul.f32 %v273, %v273
    %v276 = vmul.f32 %v274, %v274
    %v277 = vsel %vm257, %v275, 0.0
    %278 = vadd.xlane.f32.xlu0 %v277
    %v279 = vpop.xlane.xlu0 %278
    %v280 = vsel %vm257, %v276, 0.0
    %281 = vadd.xlane.f32.xlu0 %v280
    %v282 = vpop.xlane.xlu0 %281
    %v283 = vmul.f32 %v279, %v270
    %v284 = vmul.f32 %v282, %v270
    %v285 = vadd.f32 %v283, 1e-12
    %v286 = vadd.f32 %v284, 1e-12
    %v287 = vrsqrt.pop %v285
    %v288 = vmul.f32 %v287, %v285
    %v289 = vmul.f32 %v288, %v287
    %v290 = vmul.f32 0.5, %v289
    %v291 = vsub.f32 1.5, %v290
    %v292 = vmul.f32 %v287, %v291
    %vm293 = vweird.f32 %v285
    %vm294 = vweird.f32 %v287
    %vm295 = vmor %vm293, %vm294
    %v296 = vsel %vm295, %v287, %v292
    %v297 = vrsqrt.pop %v286
    %v298 = vmul.f32 %v297, %v286
    %v299 = vmul.f32 %v298, %v297
    %v300 = vmul.f32 0.5, %v299
    %v301 = vsub.f32 1.5, %v300
    %v302 = vmul.f32 %v297, %v301
    %vm303 = vweird.f32 %v286
    %vm304 = vweird.f32 %v297
    %vm305 = vmor %vm303, %vm304
    %v306 = vsel %vm305, %v297, %v302
    %v307 = vmul.f32 %v273, %v296
    %v308 = vmul.f32 %v274, %v306
    %v310 = vperm.slane %v255, 0
    %v312 = vmul.f32 %v307, %v310
    %v313 = vmul.f32 %v308, %v310
    %v315 = vperm.slane %v256, 0
    %v317 = vadd.f32 %v312, %v315
    %v318 = vadd.f32 %v313, %v315
    %v319 = vsel 1, %v317, %v186
    %v320 = vsel 1, %v318, %v189
    %v321 = vld [vmem:[%s6] sm:$0xff]
    %v322 = vld [vmem:[%s6 + $0x8] sm:$0xff]
    %v323 = vld [vmem:[%s6 + $0x10] sm:$0xff]
    %v324 = vld [vmem:[%s6 + $0x18] sm:$0xff]
    %v325 = vld [vmem:[%s6 + $0x20] sm:$0xff]
    %v326 = vld [vmem:[%s6 + $0x28] sm:$0xff]
    %v327 = vld [vmem:[%s6 + $0x30] sm:$0xff]
    %v328 = vld [vmem:[%s6 + $0x38] sm:$0xff]
    %v329 = vld [vmem:[%s6 + $0x40] sm:$0xff]
    %v330 = vld [vmem:[%s6 + $0x48] sm:$0xff]
    %v331 = vld [vmem:[%s6 + $0x50] sm:$0xff]
    %v332 = vld [vmem:[%s6 + $0x58] sm:$0xff]
    %v333 = vld [vmem:[%s6 + $0x60] sm:$0xff]
    %v334 = vld [vmem:[%s6 + $0x68] sm:$0xff]
    %v335 = vld [vmem:[%s6 + $0x70] sm:$0xff]
    %v336 = vld [vmem:[%s6 + $0x78] sm:$0xff]
    %v337 = vld [vmem:[%s7] sm:$0x3]
    %v338 = vld [vmem:[%s7 + $0x2] sm:$0x3]
    %v339 = vld [vmem:[%s8] sm:$0xff]
    %v340 = vld [vmem:[%s8 + $0x8] sm:$0xff]
    %v341 = vld [vmem:[%s8 + $0x10] sm:$0xff]
    %v342 = vld [vmem:[%s8 + $0x18] sm:$0xff]
    %v343 = vld [vmem:[%s8 + $0x20] sm:$0xff]
    %v344 = vld [vmem:[%s8 + $0x28] sm:$0xff]
    %v345 = vld [vmem:[%s8 + $0x30] sm:$0xff]
    %v346 = vld [vmem:[%s8 + $0x38] sm:$0xff]
    %v347 = vld [vmem:[%s8 + $0x40] sm:$0xff]
    %v348 = vld [vmem:[%s8 + $0x48] sm:$0xff]
    %v349 = vld [vmem:[%s8 + $0x50] sm:$0xff]
    %v350 = vld [vmem:[%s8 + $0x58] sm:$0xff]
    %v351 = vld [vmem:[%s8 + $0x60] sm:$0xff]
    %v352 = vld [vmem:[%s8 + $0x68] sm:$0xff]
    %v353 = vld [vmem:[%s8 + $0x70] sm:$0xff]
    %v354 = vld [vmem:[%s8 + $0x78] sm:$0xff]
    %v355 = vld [vmem:[%s9] sm:$0x3]
    %v356 = vld [vmem:[%s9 + $0x2] sm:$0x3]
    %v357 = vld [vmem:[%s10] sm:$0xff]
    %v358 = vld [vmem:[%s10 + $0x8] sm:$0xff]
    %v359 = vld [vmem:[%s10 + $0x10] sm:$0xff]
    %v360 = vld [vmem:[%s10 + $0x18] sm:$0xff]
    %v361 = vld [vmem:[%s10 + $0x20] sm:$0xff]
    %v362 = vld [vmem:[%s10 + $0x28] sm:$0xff]
    %v363 = vld [vmem:[%s10 + $0x30] sm:$0xff]
    %v364 = vld [vmem:[%s10 + $0x38] sm:$0xff]
    %v365 = vld [vmem:[%s10 + $0x40] sm:$0xff]
    %v366 = vld [vmem:[%s10 + $0x48] sm:$0xff]
    %v367 = vld [vmem:[%s10 + $0x50] sm:$0xff]
    %v368 = vld [vmem:[%s10 + $0x58] sm:$0xff]
    %v369 = vld [vmem:[%s10 + $0x60] sm:$0xff]
    %v370 = vld [vmem:[%s10 + $0x68] sm:$0xff]
    %v371 = vld [vmem:[%s10 + $0x70] sm:$0xff]
    %v372 = vld [vmem:[%s10 + $0x78] sm:$0xff]
    %v373 = vld [vmem:[%s11] sm:$0x3]
    %v374 = vld [vmem:[%s11 + $0x2] sm:$0x3]
    %v375 = vld [vmem:[%s12] sm:$0xff]
    %v376 = vld [vmem:[%s12 + $0x8] sm:$0xff]
    %v377 = vld [vmem:[%s12 + $0x10] sm:$0xff]
    %v378 = vld [vmem:[%s12 + $0x18] sm:$0xff]
    %v379 = vld [vmem:[%s12 + $0x20] sm:$0xff]
    %v380 = vld [vmem:[%s12 + $0x28] sm:$0xff]
    %v381 = vld [vmem:[%s12 + $0x30] sm:$0xff]
    %v382 = vld [vmem:[%s12 + $0x38] sm:$0xff]
    %v383 = vld [vmem:[%s12 + $0x40] sm:$0xff]
    %v384 = vld [vmem:[%s12 + $0x48] sm:$0xff]
    %v385 = vld [vmem:[%s12 + $0x50] sm:$0xff]
    %v386 = vld [vmem:[%s12 + $0x58] sm:$0xff]
    %v387 = vld [vmem:[%s12 + $0x60] sm:$0xff]
    %v388 = vld [vmem:[%s12 + $0x68] sm:$0xff]
    %v389 = vld [vmem:[%s12 + $0x70] sm:$0xff]
    %v390 = vld [vmem:[%s12 + $0x78] sm:$0xff]
    %v391 = vld [vmem:[%s13] sm:$0x3]
    %v392 = vld [vmem:[%s13 + $0x2] sm:$0x3]
    %v393 = vld [vmem:[%s14] sm:$0x3]
    %v394 = vld [vmem:[%s14 + $0x2] sm:$0x3]
    %v395 = vld [vmem:[%s15] sm:$0x3]
    %v396 = vld [vmem:[%s15 + $0x2] sm:$0x3]
    %v397 = vld [vmem:[%s16] sm:$0xff]
    %v398 = vld [vmem:[%s16 + $0x8] sm:$0xff]
    %v399 = vld [vmem:[%s16 + $0x10] sm:$0xff]
    %v400 = vld [vmem:[%s16 + $0x18] sm:$0xff]
    %v401 = vld [vmem:[%s16 + $0x20] sm:$0xff]
    %v402 = vld [vmem:[%s16 + $0x28] sm:$0xff]
    %v403 = vld [vmem:[%s16 + $0x30] sm:$0xff]
    %v404 = vld [vmem:[%s16 + $0x38] sm:$0xff]
    %v405 = vld [vmem:[%s16 + $0x40] sm:$0xff]
    %v406 = vld [vmem:[%s16 + $0x48] sm:$0xff]
    %v407 = vld [vmem:[%s16 + $0x50] sm:$0xff]
    %v408 = vld [vmem:[%s16 + $0x58] sm:$0xff]
    %v409 = vld [vmem:[%s16 + $0x60] sm:$0xff]
    %v410 = vld [vmem:[%s16 + $0x68] sm:$0xff]
    %v411 = vld [vmem:[%s16 + $0x70] sm:$0xff]
    %v412 = vld [vmem:[%s16 + $0x78] sm:$0xff]
    %v413 = vld [vmem:[%s17] sm:$0x3]
    %v414 = vld [vmem:[%s17 + $0x2] sm:$0x3]
    %v415 = vld [vmem:[%s18] sm:$0xff]
    %v416 = vld [vmem:[%s18 + $0x8] sm:$0xff]
    %v417 = vld [vmem:[%s18 + $0x10] sm:$0xff]
    %v418 = vld [vmem:[%s18 + $0x18] sm:$0xff]
    %v419 = vld [vmem:[%s18 + $0x20] sm:$0xff]
    %v420 = vld [vmem:[%s18 + $0x28] sm:$0xff]
    %v421 = vld [vmem:[%s18 + $0x30] sm:$0xff]
    %v422 = vld [vmem:[%s18 + $0x38] sm:$0xff]
    %v423 = vld [vmem:[%s18 + $0x40] sm:$0xff]
    %v424 = vld [vmem:[%s18 + $0x48] sm:$0xff]
    %v425 = vld [vmem:[%s18 + $0x50] sm:$0xff]
    %v426 = vld [vmem:[%s18 + $0x58] sm:$0xff]
    %v427 = vld [vmem:[%s18 + $0x60] sm:$0xff]
    %v428 = vld [vmem:[%s18 + $0x68] sm:$0xff]
    %v429 = vld [vmem:[%s18 + $0x70] sm:$0xff]
    %v430 = vld [vmem:[%s18 + $0x78] sm:$0xff]
    %v431 = vld [vmem:[%s18 + $0x80] sm:$0xff]
    %v432 = vld [vmem:[%s18 + $0x88] sm:$0xff]
    %v433 = vld [vmem:[%s18 + $0x90] sm:$0xff]
    %v434 = vld [vmem:[%s18 + $0x98] sm:$0xff]
    %v435 = vld [vmem:[%s18 + $0xa0] sm:$0xff]
    %v436 = vld [vmem:[%s18 + $0xa8] sm:$0xff]
    %v437 = vld [vmem:[%s18 + $0xb0] sm:$0xff]
    %v438 = vld [vmem:[%s18 + $0xb8] sm:$0xff]
    %v439 = vld [vmem:[%s18 + $0xc0] sm:$0xff]
    %v440 = vld [vmem:[%s18 + $0xc8] sm:$0xff]
    %v441 = vld [vmem:[%s18 + $0xd0] sm:$0xff]
    %v442 = vld [vmem:[%s18 + $0xd8] sm:$0xff]
    %v443 = vld [vmem:[%s18 + $0xe0] sm:$0xff]
    %v444 = vld [vmem:[%s18 + $0xe8] sm:$0xff]
    %v445 = vld [vmem:[%s18 + $0xf0] sm:$0xff]
    %v446 = vld [vmem:[%s18 + $0xf8] sm:$0xff]
    %v447 = vld [vmem:[%s18 + $0x100] sm:$0xff]
    %v448 = vld [vmem:[%s18 + $0x108] sm:$0xff]
    %v449 = vld [vmem:[%s18 + $0x110] sm:$0xff]
    %v450 = vld [vmem:[%s18 + $0x118] sm:$0xff]
    %v451 = vld [vmem:[%s18 + $0x120] sm:$0xff]
    %v452 = vld [vmem:[%s18 + $0x128] sm:$0xff]
    %v453 = vld [vmem:[%s18 + $0x130] sm:$0xff]
    %v454 = vld [vmem:[%s18 + $0x138] sm:$0xff]
    %v455 = vld [vmem:[%s18 + $0x140] sm:$0xff]
    %v456 = vld [vmem:[%s18 + $0x148] sm:$0xff]
    %v457 = vld [vmem:[%s18 + $0x150] sm:$0xff]
    %v458 = vld [vmem:[%s18 + $0x158] sm:$0xff]
    %v459 = vld [vmem:[%s18 + $0x160] sm:$0xff]
    %v460 = vld [vmem:[%s18 + $0x168] sm:$0xff]
    %v461 = vld [vmem:[%s18 + $0x170] sm:$0xff]
    %v462 = vld [vmem:[%s18 + $0x178] sm:$0xff]
    %v463 = vld [vmem:[%s18 + $0x180] sm:$0xff]
    %v464 = vld [vmem:[%s18 + $0x188] sm:$0xff]
    %v465 = vld [vmem:[%s18 + $0x190] sm:$0xff]
    %v466 = vld [vmem:[%s18 + $0x198] sm:$0xff]
    %v467 = vld [vmem:[%s18 + $0x1a0] sm:$0xff]
    %v468 = vld [vmem:[%s18 + $0x1a8] sm:$0xff]
    %v469 = vld [vmem:[%s18 + $0x1b0] sm:$0xff]
    %v470 = vld [vmem:[%s18 + $0x1b8] sm:$0xff]
    %v471 = vld [vmem:[%s18 + $0x1c0] sm:$0xff]
    %v472 = vld [vmem:[%s18 + $0x1c8] sm:$0xff]
    %v473 = vld [vmem:[%s18 + $0x1d0] sm:$0xff]
    %v474 = vld [vmem:[%s18 + $0x1d8] sm:$0xff]
    %v475 = vld [vmem:[%s18 + $0x1e0] sm:$0xff]
    %v476 = vld [vmem:[%s18 + $0x1e8] sm:$0xff]
    %v477 = vld [vmem:[%s18 + $0x1f0] sm:$0xff]
    %v478 = vld [vmem:[%s18 + $0x1f8] sm:$0xff]
    %v479 = vld [vmem:[%s19] sm:$0x3]
    %v480 = vld [vmem:[%s19 + $0x2] sm:$0x3]
    %v481 = vld [vmem:[%s20] sm:$0x3]
    %v482 = vld [vmem:[%s20 + $0x2] sm:$0x3]
    %v483 = vld [vmem:[%s21] sm:$0x3]
    %v484 = vld [vmem:[%s21 + $0x2] sm:$0x3]
    %v485 = vperm.slane %v337, 0
    %v486 = vperm.slane %v338, 0
    %v488 = vsel %vm257, %v319, 0
    %490 = vmatpush.msra.mxu0 0.0
    %491 = vmatpush.msra.mxu0 0.0
    %492 = vmatpush.msra.mxu0 0.0
    %493 = vmatpush.msra.mxu0 0.0
    %494 = vmatpush.msra.mxu0 0.0
    %495 = vmatpush.msra.mxu0 0.0
    %496 = vmatpush.msra.mxu0 0.0
    %497 = vmatpush.msra.mxu0 0.0
    %498 = vmatpush.msra.mxu0 0.0
    %499 = vmatpush.msra.mxu0 0.0
    %500 = vmatpush.msra.mxu0 0.0
    %501 = vmatpush.msra.mxu0 0.0
    %502 = vmatpush.msra.mxu0 %v324
    %503 = vmatpush.msra.mxu0 %v323
    %504 = vmatpush.msra.mxu0 %v322
    %505 = vmatpush.msra.mxu0 %v321
    %506 = vmatmul.f32.gmra.mxu0 %v488
    %v507 = vpop.f32.mrf.mxu0
    %v508 = vadd.f32 %v485, %v507
    %509 = vdwg.mxu0
    %v511 = vsel %vm257, %v320, 0
    %513 = vmatpush.msra.mxu0 0.0
    %514 = vmatpush.msra.mxu0 0.0
    %515 = vmatpush.msra.mxu0 0.0
    %516 = vmatpush.msra.mxu0 0.0
    %517 = vmatpush.msra.mxu0 0.0
    %518 = vmatpush.msra.mxu0 0.0
    %519 = vmatpush.msra.mxu0 0.0
    %520 = vmatpush.msra.mxu0 0.0
    %521 = vmatpush.msra.mxu0 0.0
    %522 = vmatpush.msra.mxu0 0.0
    %523 = vmatpush.msra.mxu0 0.0
    %524 = vmatpush.msra.mxu0 0.0
    %525 = vmatpush.msra.mxu0 %v332
    %526 = vmatpush.msra.mxu0 %v331
    %527 = vmatpush.msra.mxu0 %v330
    %528 = vmatpush.msra.mxu0 %v329
    %529 = vmatmul.f32.gmra.mxu0 %v511
    %v530 = vpop.f32.mrf.mxu0
    %v531 = vadd.f32 %v486, %v530
    %532 = vdwg.mxu0
    %v533 = vperm.slane %v355, 0
    %v534 = vperm.slane %v356, 0
    %535 = vmatpush.msra.mxu0 0.0
    %536 = vmatpush.msra.mxu0 0.0
    %537 = vmatpush.msra.mxu0 0.0
    %538 = vmatpush.msra.mxu0 0.0
    %539 = vmatpush.msra.mxu0 0.0
    %540 = vmatpush.msra.mxu0 0.0
    %541 = vmatpush.msra.mxu0 0.0
    %542 = vmatpush.msra.mxu0 0.0
    %543 = vmatpush.msra.mxu0 0.0
    %544 = vmatpush.msra.mxu0 0.0
    %545 = vmatpush.msra.mxu0 0.0
    %546 = vmatpush.msra.mxu0 0.0
    %547 = vmatpush.msra.mxu0 %v342
    %548 = vmatpush.msra.mxu0 %v341
    %549 = vmatpush.msra.mxu0 %v340
    %550 = vmatpush.msra.mxu0 %v339
    %551 = vmatmul.f32.gmra.mxu0 %v488
    %v552 = vpop.f32.mrf.mxu0
    %v553 = vadd.f32 %v533, %v552
    %554 = vdwg.mxu0
    %555 = vmatpush.msra.mxu0 0.0
    %556 = vmatpush.msra.mxu0 0.0
    %557 = vmatpush.msra.mxu0 0.0
    %558 = vmatpush.msra.mxu0 0.0
    %559 = vmatpush.msra.mxu0 0.0
    %560 = vmatpush.msra.mxu0 0.0
    %561 = vmatpush.msra.mxu0 0.0
    %562 = vmatpush.msra.mxu0 0.0
    %563 = vmatpush.msra.mxu0 0.0
    %564 = vmatpush.msra.mxu0 0.0
    %565 = vmatpush.msra.mxu0 0.0
    %566 = vmatpush.msra.mxu0 0.0
    %567 = vmatpush.msra.mxu0 %v350
    %568 = vmatpush.msra.mxu0 %v349
    %569 = vmatpush.msra.mxu0 %v348
    %570 = vmatpush.msra.mxu0 %v347
    %571 = vmatmul.f32.gmra.mxu0 %v511
    %v572 = vpop.f32.mrf.mxu0
    %v573 = vadd.f32 %v534, %v572
    %574 = vdwg.mxu0
    %v575 = vperm.slane %v373, 0
    %v576 = vperm.slane %v374, 0
    %577 = vmatpush.msra.mxu0 0.0
    %578 = vmatpush.msra.mxu0 0.0
    %579 = vmatpush.msra.mxu0 0.0
    %580 = vmatpush.msra.mxu0 0.0
    %581 = vmatpush.msra.mxu0 0.0
    %582 = vmatpush.msra.mxu0 0.0
    %583 = vmatpush.msra.mxu0 0.0
    %584 = vmatpush.msra.mxu0 0.0
    %585 = vmatpush.msra.mxu0 0.0
    %586 = vmatpush.msra.mxu0 0.0
    %587 = vmatpush.msra.mxu0 0.0
    %588 = vmatpush.msra.mxu0 0.0
    %589 = vmatpush.msra.mxu0 %v360
    %590 = vmatpush.msra.mxu0 %v359
    %591 = vmatpush.msra.mxu0 %v358
    %592 = vmatpush.msra.mxu0 %v357
    %593 = vmatmul.f32.gmra.mxu0 %v488
    %v594 = vpop.f32.mrf.mxu0
    %v595 = vadd.f32 %v575, %v594
    %596 = vdwg.mxu0
    %597 = vmatpush.msra.mxu0 0.0
    %598 = vmatpush.msra.mxu0 0.0
    %599 = vmatpush.msra.mxu0 0.0
    %600 = vmatpush.msra.mxu0 0.0
    %601 = vmatpush.msra.mxu0 0.0
    %602 = vmatpush.msra.mxu0 0.0
    %603 = vmatpush.msra.mxu0 0.0
    %604 = vmatpush.msra.mxu0 0.0
    %605 = vmatpush.msra.mxu0 0.0
    %606 = vmatpush.msra.mxu0 0.0
    %607 = vmatpush.msra.mxu0 0.0
    %608 = vmatpush.msra.mxu0 0.0
    %609 = vmatpush.msra.mxu0 %v368
    %610 = vmatpush.msra.mxu0 %v367
    %611 = vmatpush.msra.mxu0 %v366
    %612 = vmatpush.msra.mxu0 %v365
    %613 = vmatmul.f32.gmra.mxu0 %v511
    %v614 = vpop.f32.mrf.mxu0
    %v615 = vadd.f32 %v576, %v614
    %616 = vdwg.mxu0
    %vm617 = vcmask 130048
    %v619 = vsel %vm617, %v508, 0
    %v622 = vsel %vm617, %v553, 0
    %624 = vmatpush.xpose.msra.mxu0 0.0
    %625 = vmatpush.xpose.msra.mxu0 0.0
    %626 = vmatpush.xpose.msra.mxu0 0.0
    %627 = vmatpush.xpose.msra.mxu0 0.0
    %628 = vmatpush.xpose.msra.mxu0 0.0
    %629 = vmatpush.xpose.msra.mxu0 0.0
    %630 = vmatpush.xpose.msra.mxu0 0.0
    %631 = vmatpush.xpose.msra.mxu0 0.0
    %632 = vmatpush.xpose.msra.mxu0 0.0
    %633 = vmatpush.xpose.msra.mxu0 0.0
    %634 = vmatpush.xpose.msra.mxu0 0.0
    %635 = vmatpush.xpose.msra.mxu0 0.0
    %636 = vmatpush.xpose.msra.mxu0 0.0
    %637 = vmatpush.xpose.msra.mxu0 0.0
    %638 = vmatpush.xpose.msra.mxu0 0.0
    %639 = vmatpush.xpose.msra.mxu0 %v622
    %640 = vmatmul.f32.gmra.mxu0 %v619
    %v641 = vpop.f32.mrf.mxu0
    %v642 = vadd.f32 0.0, %v641
    %643 = vdwg.mxu0
    %v645 = vsel %vm617, %v531, 0
    %v648 = vsel %vm617, %v573, 0
    %650 = vmatpush.xpose.msra.mxu0 0.0
    %651 = vmatpush.xpose.msra.mxu0 0.0
    %652 = vmatpush.xpose.msra.mxu0 0.0
    %653 = vmatpush.xpose.msra.mxu0 0.0
    %654 = vmatpush.xpose.msra.mxu0 0.0
    %655 = vmatpush.xpose.msra.mxu0 0.0
    %656 = vmatpush.xpose.msra.mxu0 0.0
    %657 = vmatpush.xpose.msra.mxu0 0.0
    %658 = vmatpush.xpose.msra.mxu0 0.0
    %659 = vmatpush.xpose.msra.mxu0 0.0
    %660 = vmatpush.xpose.msra.mxu0 0.0
    %661 = vmatpush.xpose.msra.mxu0 0.0
    %662 = vmatpush.xpose.msra.mxu0 0.0
    %663 = vmatpush.xpose.msra.mxu0 0.0
    %664 = vmatpush.xpose.msra.mxu0 0.0
    %665 = vmatpush.xpose.msra.mxu0 %v648
    %666 = vmatmul.f32.gmra.mxu0 %v645
    %v667 = vpop.f32.mrf.mxu0
    %v668 = vadd.f32 0.0, %v667
    %669 = vdwg.mxu0
    %v670 = vmul.f32 %v642, 0.25
    %v671 = vmul.f32 %v668, 0.25
    %v673 = vrot.slane %v251, 1
    %v674 = vperm.slane %v251, 0
    %v675 = vperm.slane %v673, 0
    %v678 = vadd.f32 %v670, %v674
    %v679 = vadd.f32 %v671, %v675
    %vm680 = vcmask 64512
    %v681 = vsel %vm680, %v678, -inf
    %682 = vmax.xlane.f32.xlu0 %v681
    %v683 = vpop.xlane.xlu0 %682
    %v684 = vsel %vm680, %v679, -inf
    %685 = vmax.xlane.f32.xlu0 %v684
    %v686 = vpop.xlane.xlu0 %685
    %v687 = vsub.f32 %v678, %v683
    %v688 = vsub.f32 %v679, %v686
    %v689 = vmul.f32 %v687, 1.442695
    %v690 = vpow.pop %v689
    %v691 = vmul.f32 %v688, 1.442695
    %v692 = vpow.pop %v691
    %v693 = vsel %vm680, %v690, 0.0
    %694 = vadd.xlane.f32.xlu0 %v693
    %v695 = vpop.xlane.xlu0 %694
    %v696 = vsel %vm680, %v692, 0.0
    %697 = vadd.xlane.f32.xlu0 %v696
    %v698 = vpop.xlane.xlu0 %697
    %v699 = vrcp.pop %v695
    %v700 = vrcp.pop %v698
    %v701 = vmul.f32 %v690, %v699
    %v702 = vmul.f32 %v692, %v700
    %v704 = vsel %vm680, %v701, 0
    %706 = vmatpush.msra.mxu0 0.0
    %707 = vmatpush.msra.mxu0 0.0
    %708 = vmatpush.msra.mxu0 0.0
    %709 = vmatpush.msra.mxu0 0.0
    %710 = vmatpush.msra.mxu0 0.0
    %711 = vmatpush.msra.mxu0 0.0
    %712 = vmatpush.msra.mxu0 0.0
    %713 = vmatpush.msra.mxu0 0.0
    %714 = vmatpush.msra.mxu0 0.0
    %715 = vmatpush.msra.mxu0 0.0
    %716 = vmatpush.msra.mxu0 0.0
    %717 = vmatpush.msra.mxu0 0.0
    %718 = vmatpush.msra.mxu0 0.0
    %719 = vmatpush.msra.mxu0 0.0
    %720 = vmatpush.msra.mxu0 0.0
    %721 = vmatpush.msra.mxu0 %v595
    %722 = vmatmul.f32.gmra.mxu0 %v704
    %v723 = vpop.f32.mrf.mxu0
    %v724 = vadd.f32 0.0, %v723
    %725 = vdwg.mxu0
    %v727 = vsel %vm680, %v702, 0
    %729 = vmatpush.msra.mxu0 0.0
    %730 = vmatpush.msra.mxu0 0.0
    %731 = vmatpush.msra.mxu0 0.0
    %732 = vmatpush.msra.mxu0 0.0
    %733 = vmatpush.msra.mxu0 0.0
    %734 = vmatpush.msra.mxu0 0.0
    %735 = vmatpush.msra.mxu0 0.0
    %736 = vmatpush.msra.mxu0 0.0
    %737 = vmatpush.msra.mxu0 0.0
    %738 = vmatpush.msra.mxu0 0.0
    %739 = vmatpush.msra.mxu0 0.0
    %740 = vmatpush.msra.mxu0 0.0
    %741 = vmatpush.msra.mxu0 0.0
    %742 = vmatpush.msra.mxu0 0.0
    %743 = vmatpush.msra.mxu0 0.0
    %744 = vmatpush.msra.mxu0 %v615
    %745 = vmatmul.f32.gmra.mxu0 %v727
    %v746 = vpop.f32.mrf.mxu0
    %v747 = vadd.f32 0.0, %v746
    %748 = vdwg.mxu0
    %749 = vrot.lane.b32.xlu0 %v508, 112
    %v750 = vpop.permute.xlu0 %749
    %751 = vrot.lane.b32.xlu0 %v553, 112
    %v752 = vpop.permute.xlu0 %751
    %v753 = vsel %vm617, %v750, 0
    %v755 = vsel %vm617, %v752, 0
    %757 = vmatpush.xpose.msra.mxu0 0.0
    %758 = vmatpush.xpose.msra.mxu0 0.0
    %759 = vmatpush.xpose.msra.mxu0 0.0
    %760 = vmatpush.xpose.msra.mxu0 0.0
    %761 = vmatpush.xpose.msra.mxu0 0.0
    %762 = vmatpush.xpose.msra.mxu0 0.0
    %763 = vmatpush.xpose.msra.mxu0 0.0
    %764 = vmatpush.xpose.msra.mxu0 0.0
    %765 = vmatpush.xpose.msra.mxu0 0.0
    %766 = vmatpush.xpose.msra.mxu0 0.0
    %767 = vmatpush.xpose.msra.mxu0 0.0
    %768 = vmatpush.xpose.msra.mxu0 0.0
    %769 = vmatpush.xpose.msra.mxu0 0.0
    %770 = vmatpush.xpose.msra.mxu0 0.0
    %771 = vmatpush.xpose.msra.mxu0 0.0
    %772 = vmatpush.xpose.msra.mxu0 %v755
    %773 = vmatmul.f32.gmra.mxu0 %v753
    %v774 = vpop.f32.mrf.mxu0
    %v775 = vadd.f32 0.0, %v774
    %776 = vdwg.mxu0
    %777 = vrot.lane.b32.xlu0 %v531, 112
    %v778 = vpop.permute.xlu0 %777
    %779 = vrot.lane.b32.xlu0 %v573, 112
    %v780 = vpop.permute.xlu0 %779
    %v781 = vsel %vm617, %v778, 0
    %v783 = vsel %vm617, %v780, 0
    %785 = vmatpush.xpose.msra.mxu0 0.0
    %786 = vmatpush.xpose.msra.mxu0 0.0
    %787 = vmatpush.xpose.msra.mxu0 0.0
    %788 = vmatpush.xpose.msra.mxu0 0.0
    %789 = vmatpush.xpose.msra.mxu0 0.0
    %790 = vmatpush.xpose.msra.mxu0 0.0
    %791 = vmatpush.xpose.msra.mxu0 0.0
    %792 = vmatpush.xpose.msra.mxu0 0.0
    %793 = vmatpush.xpose.msra.mxu0 0.0
    %794 = vmatpush.xpose.msra.mxu0 0.0
    %795 = vmatpush.xpose.msra.mxu0 0.0
    %796 = vmatpush.xpose.msra.mxu0 0.0
    %797 = vmatpush.xpose.msra.mxu0 0.0
    %798 = vmatpush.xpose.msra.mxu0 0.0
    %799 = vmatpush.xpose.msra.mxu0 0.0
    %800 = vmatpush.xpose.msra.mxu0 %v783
    %801 = vmatmul.f32.gmra.mxu0 %v781
    %v802 = vpop.f32.mrf.mxu0
    %v803 = vadd.f32 0.0, %v802
    %804 = vdwg.mxu0
    %v805 = vmul.f32 %v775, 0.25
    %v806 = vmul.f32 %v803, 0.25
    %v807 = vadd.f32 %v805, %v674
    %v808 = vadd.f32 %v806, %v675
    %v809 = vsel %vm680, %v807, -inf
    %810 = vmax.xlane.f32.xlu0 %v809
    %v811 = vpop.xlane.xlu0 %810
    %v812 = vsel %vm680, %v808, -inf
    %813 = vmax.xlane.f32.xlu0 %v812
    %v814 = vpop.xlane.xlu0 %813
    %v815 = vsub.f32 %v807, %v811
    %v816 = vsub.f32 %v808, %v814
    %v817 = vmul.f32 %v815, 1.442695
    %v818 = vpow.pop %v817
    %v819 = vmul.f32 %v816, 1.442695
    %v820 = vpow.pop %v819
    %v821 = vsel %vm680, %v818, 0.0
    %822 = vadd.xlane.f32.xlu0 %v821
    %v823 = vpop.xlane.xlu0 %822
    %v824 = vsel %vm680, %v820, 0.0
    %825 = vadd.xlane.f32.xlu0 %v824
    %v826 = vpop.xlane.xlu0 %825
    %v827 = vrcp.pop %v823
    %v828 = vrcp.pop %v826
    %v829 = vmul.f32 %v818, %v827
    %v830 = vmul.f32 %v820, %v828
    %832 = vrot.lane.b32.xlu0 %v595, 112
    %v833 = vpop.permute.xlu0 %832
    %v836 = vsel %vm680, %v829, 0
    %838 = vmatpush.msra.mxu0 0.0
    %839 = vmatpush.msra.mxu0 0.0
    %840 = vmatpush.msra.mxu0 0.0
    %841 = vmatpush.msra.mxu0 0.0
    %842 = vmatpush.msra.mxu0 0.0
    %843 = vmatpush.msra.mxu0 0.0
    %844 = vmatpush.msra.mxu0 0.0
    %845 = vmatpush.msra.mxu0 0.0
    %846 = vmatpush.msra.mxu0 0.0
    %847 = vmatpush.msra.mxu0 0.0
    %848 = vmatpush.msra.mxu0 0.0
    %849 = vmatpush.msra.mxu0 0.0
    %850 = vmatpush.msra.mxu0 0.0
    %851 = vmatpush.msra.mxu0 0.0
    %852 = vmatpush.msra.mxu0 0.0
    %853 = vmatpush.msra.mxu0 %v833
    %854 = vmatmul.f32.gmra.mxu0 %v836
    %v855 = vpop.f32.mrf.mxu0
    %v856 = vadd.f32 0.0, %v855
    %857 = vdwg.mxu0
    %859 = vrot.lane.b32.xlu0 %v615, 112
    %v860 = vpop.permute.xlu0 %859
    %v863 = vsel %vm680, %v830, 0
    %865 = vmatpush.msra.mxu0 0.0
    %866 = vmatpush.msra.mxu0 0.0
    %867 = vmatpush.msra.mxu0 0.0
    %868 = vmatpush.msra.mxu0 0.0
    %869 = vmatpush.msra.mxu0 0.0
    %870 = vmatpush.msra.mxu0 0.0
    %871 = vmatpush.msra.mxu0 0.0
    %872 = vmatpush.msra.mxu0 0.0
    %873 = vmatpush.msra.mxu0 0.0
    %874 = vmatpush.msra.mxu0 0.0
    %875 = vmatpush.msra.mxu0 0.0
    %876 = vmatpush.msra.mxu0 0.0
    %877 = vmatpush.msra.mxu0 0.0
    %878 = vmatpush.msra.mxu0 0.0
    %879 = vmatpush.msra.mxu0 0.0
    %880 = vmatpush.msra.mxu0 %v860
    %881 = vmatmul.f32.gmra.mxu0 %v863
    %v882 = vpop.f32.mrf.mxu0
    %v883 = vadd.f32 0.0, %v882
    %884 = vdwg.mxu0
    %887 = vrot.lane.b32.xlu0 %v856, 16
    %v888 = vpop.permute.xlu0 %887
    %889 = vrot.lane.b32.xlu0 %v883, 16
    %v890 = vpop.permute.xlu0 %889
    %v893 = vsel %vm617, %v724, %v888
    %v894 = vsel %vm617, %v747, %v890
    %v895 = vperm.slane %v391, 0
    %v896 = vperm.slane %v392, 0
    %v898 = vsel %vm257, %v893, 0
    %900 = vmatpush.msra.mxu0 0.0
    %901 = vmatpush.msra.mxu0 0.0
    %902 = vmatpush.msra.mxu0 0.0
    %903 = vmatpush.msra.mxu0 0.0
    %904 = vmatpush.msra.mxu0 0.0
    %905 = vmatpush.msra.mxu0 0.0
    %906 = vmatpush.msra.mxu0 0.0
    %907 = vmatpush.msra.mxu0 0.0
    %908 = vmatpush.msra.mxu0 0.0
    %909 = vmatpush.msra.mxu0 0.0
    %910 = vmatpush.msra.mxu0 0.0
    %911 = vmatpush.msra.mxu0 0.0
    %912 = vmatpush.msra.mxu0 %v378
    %913 = vmatpush.msra.mxu0 %v377
    %914 = vmatpush.msra.mxu0 %v376
    %915 = vmatpush.msra.mxu0 %v375
    %916 = vmatmul.f32.gmra.mxu0 %v898
    %v917 = vpop.f32.mrf.mxu0
    %v918 = vadd.f32 %v895, %v917
    %919 = vdwg.mxu0
    %v921 = vsel %vm257, %v894, 0
    %923 = vmatpush.msra.mxu0 0.0
    %924 = vmatpush.msra.mxu0 0.0
    %925 = vmatpush.msra.mxu0 0.0
    %926 = vmatpush.msra.mxu0 0.0
    %927 = vmatpush.msra.mxu0 0.0
    %928 = vmatpush.msra.mxu0 0.0
    %929 = vmatpush.msra.mxu0 0.0
    %930 = vmatpush.msra.mxu0 0.0
    %931 = vmatpush.msra.mxu0 0.0
    %932 = vmatpush.msra.mxu0 0.0
    %933 = vmatpush.msra.mxu0 0.0
    %934 = vmatpush.msra.mxu0 0.0
    %935 = vmatpush.msra.mxu0 %v386
    %936 = vmatpush.msra.mxu0 %v385
    %937 = vmatpush.msra.mxu0 %v384
    %938 = vmatpush.msra.mxu0 %v383
    %939 = vmatmul.f32.gmra.mxu0 %v921
    %v940 = vpop.f32.mrf.mxu0
    %v941 = vadd.f32 %v896, %v940
    %942 = vdwg.mxu0
    %v943 = vadd.f32 %v918, %v319
    %v944 = vadd.f32 %v941, %v320
    %v945 = vsel %vm257, %v943, 0.0
    %946 = vadd.xlane.f32.xlu0 %v945
    %v947 = vpop.xlane.xlu0 %946
    %v948 = vsel %vm257, %v944, 0.0
    %949 = vadd.xlane.f32.xlu0 %v948
    %v950 = vpop.xlane.xlu0 %949
    %v951 = vmul.f32 %v947, %v270
    %v952 = vmul.f32 %v950, %v270
    %v953 = vsub.f32 %v943, %v951
    %v954 = vsub.f32 %v944, %v952
    %v955 = vmul.f32 %v953, %v953
    %v956 = vmul.f32 %v954, %v954
    %v957 = vsel %vm257, %v955, 0.0
    %958 = vadd.xlane.f32.xlu0 %v957
    %v959 = vpop.xlane.xlu0 %958
    %v960 = vsel %vm257, %v956, 0.0
    %961 = vadd.xlane.f32.xlu0 %v960
    %v962 = vpop.xlane.xlu0 %961
    %v963 = vmul.f32 %v959, %v270
    %v964 = vmul.f32 %v962, %v270
    %v965 = vadd.f32 %v963, 1e-12
    %v966 = vadd.f32 %v964, 1e-12
    %v967 = vrsqrt.pop %v965
    %v968 = vmul.f32 %v967, %v965
    %v969 = vmul.f32 %v968, %v967
    %v970 = vmul.f32 0.5, %v969
    %v971 = vsub.f32 1.5, %v970
    %v972 = vmul.f32 %v967, %v971
    %vm973 = vweird.f32 %v965
    %vm974 = vweird.f32 %v967
    %vm975 = vmor %vm973, %vm974
    %v976 = vsel %vm975, %v967, %v972
    %v977 = vrsqrt.pop %v966
    %v978 = vmul.f32 %v977, %v966
    %v979 = vmul.f32 %v978, %v977
    %v980 = vmul.f32 0.5, %v979
    %v981 = vsub.f32 1.5, %v980
    %v982 = vmul.f32 %v977, %v981
    %vm983 = vweird.f32 %v966
    %vm984 = vweird.f32 %v977
    %vm985 = vmor %vm983, %vm984
    %v986 = vsel %vm985, %v977, %v982
    %v987 = vmul.f32 %v953, %v976
    %v988 = vmul.f32 %v954, %v986
    %v989 = vperm.slane %v393, 0
    %v990 = vperm.slane %v394, 0
    %v991 = vmul.f32 %v987, %v989
    %v992 = vmul.f32 %v988, %v990
    %v993 = vperm.slane %v395, 0
    %v994 = vperm.slane %v396, 0
    %v995 = vadd.f32 %v991, %v993
    %v996 = vadd.f32 %v992, %v994
    %v997 = vperm.slane %v413, 0
    %v998 = vperm.slane %v414, 0
    %v1000 = vsel %vm257, %v995, 0
    %1002 = vmatpush.msra.mxu0 0.0
    %1003 = vmatpush.msra.mxu0 0.0
    %1004 = vmatpush.msra.mxu0 0.0
    %1005 = vmatpush.msra.mxu0 0.0
    %1006 = vmatpush.msra.mxu0 0.0
    %1007 = vmatpush.msra.mxu0 0.0
    %1008 = vmatpush.msra.mxu0 0.0
    %1009 = vmatpush.msra.mxu0 0.0
    %1010 = vmatpush.msra.mxu0 0.0
    %1011 = vmatpush.msra.mxu0 0.0
    %1012 = vmatpush.msra.mxu0 0.0
    %1013 = vmatpush.msra.mxu0 0.0
    %1014 = vmatpush.msra.mxu0 %v400
    %1015 = vmatpush.msra.mxu0 %v399
    %1016 = vmatpush.msra.mxu0 %v398
    %1017 = vmatpush.msra.mxu0 %v397
    %1018 = vmatmul.f32.gmra.mxu0 %v1000
    %v1019 = vpop.f32.mrf.mxu0
    %v1020 = vadd.f32 %v997, %v1019
    %1021 = vdwg.mxu0
    %v1023 = vsel %vm257, %v996, 0
    %1025 = vmatpush.msra.mxu0 0.0
    %1026 = vmatpush.msra.mxu0 0.0
    %1027 = vmatpush.msra.mxu0 0.0
    %1028 = vmatpush.msra.mxu0 0.0
    %1029 = vmatpush.msra.mxu0 0.0
    %1030 = vmatpush.msra.mxu0 0.0
    %1031 = vmatpush.msra.mxu0 0.0
    %1032 = vmatpush.msra.mxu0 0.0
    %1033 = vmatpush.msra.mxu0 0.0
    %1034 = vmatpush.msra.mxu0 0.0
    %1035 = vmatpush.msra.mxu0 0.0
    %1036 = vmatpush.msra.mxu0 0.0
    %1037 = vmatpush.msra.mxu0 %v408
    %1038 = vmatpush.msra.mxu0 %v407
    %1039 = vmatpush.msra.mxu0 %v406
    %1040 = vmatpush.msra.mxu0 %v405
    %1041 = vmatmul.f32.gmra.mxu0 %v1023
    %v1042 = vpop.f32.mrf.mxu0
    %v1043 = vadd.f32 %v998, %v1042
    %1044 = vdwg.mxu0
    %v1045 = vmul.f32 %v1020, %v1020
    %v1046 = vmul.f32 %v1043, %v1043
    %v1047 = vmul.f32 %v1020, %v1045
    %v1048 = vmul.f32 %v1043, %v1046
    %v1049 = vmul.f32 %v1047, 0.044715
    %v1050 = vmul.f32 %v1048, 0.044715
    %v1051 = vadd.f32 %v1020, %v1049
    %v1052 = vadd.f32 %v1043, %v1050
    %v1053 = vmul.f32 %v1051, 0.7978846
    %v1054 = vmul.f32 %v1052, 0.7978846
    %v1055 = vtanh.pop %v1053
    %v1056 = vtanh.pop %v1054
    %v1057 = vadd.f32 %v1055, 1.0
    %v1058 = vadd.f32 %v1056, 1.0
    %v1059 = vmul.f32 %v1057, 0.5
    %v1060 = vmul.f32 %v1058, 0.5
    %v1061 = vmul.f32 %v1020, %v1059
    %v1062 = vmul.f32 %v1043, %v1060
    %v1063 = vperm.slane %v479, 0
    %v1064 = vperm.slane %v480, 0
    %1065 = vmatpush.msra.mxu0 %v430
    %1066 = vmatpush.msra.mxu0 %v429
    %1067 = vmatpush.msra.mxu0 %v428
    %1068 = vmatpush.msra.mxu0 %v427
    %1069 = vmatpush.msra.mxu0 %v426
    %1070 = vmatpush.msra.mxu0 %v425
    %1071 = vmatpush.msra.mxu0 %v424
    %1072 = vmatpush.msra.mxu0 %v423
    %1073 = vmatpush.msra.mxu0 %v422
    %1074 = vmatpush.msra.mxu0 %v421
    %1075 = vmatpush.msra.mxu0 %v420
    %1076 = vmatpush.msra.mxu0 %v419
    %1077 = vmatpush.msra.mxu0 %v418
    %1078 = vmatpush.msra.mxu0 %v417
    %1079 = vmatpush.msra.mxu0 %v416
    %1080 = vmatpush.msra.mxu0 %v415
    %1081 = vmatmul.f32.gmra.mxu0 %v1061
    %v1082 = vpop.f32.mrf.mxu0
    %v1083 = vadd.f32 %v1063, %v1082
    %1084 = vdwg.mxu0
    %1085 = vmatpush.msra.mxu0 %v462
    %1086 = vmatpush.msra.mxu0 %v461
    %1087 = vmatpush.msra.mxu0 %v460
    %1088 = vmatpush.msra.mxu0 %v459
    %1089 = vmatpush.msra.mxu0 %v458
    %1090 = vmatpush.msra.mxu0 %v457
    %1091 = vmatpush.msra.mxu0 %v456
    %1092 = vmatpush.msra.mxu0 %v455
    %1093 = vmatpush.msra.mxu0 %v454
    %1094 = vmatpush.msra.mxu0 %v453
    %1095 = vmatpush.msra.mxu0 %v452
    %1096 = vmatpush.msra.mxu0 %v451
    %1097 = vmatpush.msra.mxu0 %v450
    %1098 = vmatpush.msra.mxu0 %v449
    %1099 = vmatpush.msra.mxu0 %v448
    %1100 = vmatpush.msra.mxu0 %v447
    %1101 = vmatmul.f32.gmra.mxu0 %v1062
    %v1102 = vpop.f32.mrf.mxu0
    %v1103 = vadd.f32 %v1064, %v1102
    %1104 = vdwg.mxu0
    %v1105 = vadd.f32 %v1083, %v995
    %v1106 = vadd.f32 %v1103, %v996
    %v1107 = vsel %vm257, %v1105, 0.0
    %1108 = vadd.xlane.f32.xlu0 %v1107
    %v1109 = vpop.xlane.xlu0 %1108
    %v1110 = vsel %vm257, %v1106, 0.0
    %1111 = vadd.xlane.f32.xlu0 %v1110
    %v1112 = vpop.xlane.xlu0 %1111
    %v1113 = vmul.f32 %v1109, %v270
    %v1114 = vmul.f32 %v1112, %v270
    %v1115 = vsub.f32 %v1105, %v1113
    %v1116 = vsub.f32 %v1106, %v1114
    %v1117 = vmul.f32 %v1115, %v1115
    %v1118 = vmul.f32 %v1116, %v1116
    %v1119 = vsel %vm257, %v1117, 0.0
    %1120 = vadd.xlane.f32.xlu0 %v1119
    %v1121 = vpop.xlane.xlu0 %1120
    %v1122 = vsel %vm257, %v1118, 0.0
    %1123 = vadd.xlane.f32.xlu0 %v1122
    %v1124 = vpop.xlane.xlu0 %1123
    %v1125 = vmul.f32 %v1121, %v270
    %v1126 = vmul.f32 %v1124, %v270
    %v1127 = vadd.f32 %v1125, 1e-12
    %v1128 = vadd.f32 %v1126, 1e-12
    %v1129 = vrsqrt.pop %v1127
    %v1130 = vmul.f32 %v1129, %v1127
    %v1131 = vmul.f32 %v1130, %v1129
    %v1132 = vmul.f32 0.5, %v1131
    %v1133 = vsub.f32 1.5, %v1132
    %v1134 = vmul.f32 %v1129, %v1133
    %vm1135 = vweird.f32 %v1127
    %vm1136 = vweird.f32 %v1129
    %vm1137 = vmor %vm1135, %vm1136
    %v1138 = vsel %vm1137, %v1129, %v1134
    %v1139 = vrsqrt.pop %v1128
    %v1140 = vmul.f32 %v1139, %v1128
    %v1141 = vmul.f32 %v1140, %v1139
    %v1142 = vmul.f32 0.5, %v1141
    %v1143 = vsub.f32 1.5, %v1142
    %v1144 = vmul.f32 %v1139, %v1143
    %vm1145 = vweird.f32 %v1128
    %vm1146 = vweird.f32 %v1139
    %vm1147 = vmor %vm1145, %vm1146
    %v1148 = vsel %vm1147, %v1139, %v1144
    %v1149 = vmul.f32 %v1115, %v1138
    %v1150 = vmul.f32 %v1116, %v1148
    %v1151 = vperm.slane %v481, 0
    %v1152 = vperm.slane %v482, 0
    %v1153 = vmul.f32 %v1149, %v1151
    %v1154 = vmul.f32 %v1150, %v1152
    %v1155 = vperm.slane %v483, 0
    %v1156 = vperm.slane %v484, 0
    %v1157 = vadd.f32 %v1153, %v1155
    %v1158 = vadd.f32 %v1154, %v1156
    %v1159 = vperm.slane %v337, 1
    %v1160 = vperm.slane %v338, 1
    %v1162 = vsel %vm257, %v1157, 0
    %1164 = vmatpush.msra.mxu0 0.0
    %1165 = vmatpush.msra.mxu0 0.0
    %1166 = vmatpush.msra.mxu0 0.0
    %1167 = vmatpush.msra.mxu0 0.0
    %1168 = vmatpush.msra.mxu0 0.0
    %1169 = vmatpush.msra.mxu0 0.0
    %1170 = vmatpush.msra.mxu0 0.0
    %1171 = vmatpush.msra.mxu0 0.0
    %1172 = vmatpush.msra.mxu0 0.0
    %1173 = vmatpush.msra.mxu0 0.0
    %1174 = vmatpush.msra.mxu0 0.0
    %1175 = vmatpush.msra.mxu0 0.0
    %1176 = vmatpush.msra.mxu0 %v328
    %1177 = vmatpush.msra.mxu0 %v327
    %1178 = vmatpush.msra.mxu0 %v326
    %1179 = vmatpush.msra.mxu0 %v325
    %1180 = vmatmul.f32.gmra.mxu0 %v1162
    %v1181 = vpop.f32.mrf.mxu0
    %v1182 = vadd.f32 %v1159, %v1181
    %1183 = vdwg.mxu0
    %v1185 = vsel %vm257, %v1158, 0
    %1187 = vmatpush.msra.mxu0 0.0
    %1188 = vmatpush.msra.mxu0 0.0
    %1189 = vmatpush.msra.mxu0 0.0
    %1190 = vmatpush.msra.mxu0 0.0
    %1191 = vmatpush.msra.mxu0 0.0
    %1192 = vmatpush.msra.mxu0 0.0
    %1193 = vmatpush.msra.mxu0 0.0
    %1194 = vmatpush.msra.mxu0 0.0
    %1195 = vmatpush.msra.mxu0 0.0
    %1196 = vmatpush.msra.mxu0 0.0
    %1197 = vmatpush.msra.mxu0 0.0
    %1198 = vmatpush.msra.mxu0 0.0
    %1199 = vmatpush.msra.mxu0 %v336
    %1200 = vmatpush.msra.mxu0 %v335
    %1201 = vmatpush.msra.mxu0 %v334
    %1202 = vmatpush.msra.mxu0 %v333
    %1203 = vmatmul.f32.gmra.mxu0 %v1185
    %v1204 = vpop.f32.mrf.mxu0
    %v1205 = vadd.f32 %v1160, %v1204
    %1206 = vdwg.mxu0
    %v1207 = vperm.slane %v355, 1
    %v1208 = vperm.slane %v356, 1
    %1209 = vmatpush.msra.mxu0 0.0
    %1210 = vmatpush.msra.mxu0 0.0
    %1211 = vmatpush.msra.mxu0 0.0
    %1212 = vmatpush.msra.mxu0 0.0
    %1213 = vmatpush.msra.mxu0 0.0
    %1214 = vmatpush.msra.mxu0 0.0
    %1215 = vmatpush.msra.mxu0 0.0
    %1216 = vmatpush.msra.mxu0 0.0
    %1217 = vmatpush.msra.mxu0 0.0
    %1218 = vmatpush.msra.mxu0 0.0
    %1219 = vmatpush.msra.mxu0 0.0
    %1220 = vmatpush.msra.mxu0 0.0
    %1221 = vmatpush.msra.mxu0 %v346
    %1222 = vmatpush.msra.mxu0 %v345
    %1223 = vmatpush.msra.mxu0 %v344
    %1224 = vmatpush.msra.mxu0 %v343
    %1225 = vmatmul.f32.gmra.mxu0 %v1162
    %v1226 = vpop.f32.mrf.mxu0
    %v1227 = vadd.f32 %v1207, %v1226
    %1228 = vdwg.mxu0
    %1229 = vmatpush.msra.mxu0 0.0
    %1230 = vmatpush.msra.mxu0 0.0
    %1231 = vmatpush.msra.mxu0 0.0
    %1232 = vmatpush.msra.mxu0 0.0
    %1233 = vmatpush.msra.mxu0 0.0
    %1234 = vmatpush.msra.mxu0 0.0
    %1235 = vmatpush.msra.mxu0 0.0
    %1236 = vmatpush.msra.mxu0 0.0
    %1237 = vmatpush.msra.mxu0 0.0
    %1238 = vmatpush.msra.mxu0 0.0
    %1239 = vmatpush.msra.mxu0 0.0
    %1240 = vmatpush.msra.mxu0 0.0
    %1241 = vmatpush.msra.mxu0 %v354
    %1242 = vmatpush.msra.mxu0 %v353
    %1243 = vmatpush.msra.mxu0 %v352
    %1244 = vmatpush.msra.mxu0 %v351
    %1245 = vmatmul.f32.gmra.mxu0 %v1185
    %v1246 = vpop.f32.mrf.mxu0
    %v1247 = vadd.f32 %v1208, %v1246
    %1248 = vdwg.mxu0
    %v1249 = vperm.slane %v373, 1
    %v1250 = vperm.slane %v374, 1
    %1251 = vmatpush.msra.mxu0 0.0
    %1252 = vmatpush.msra.mxu0 0.0
    %1253 = vmatpush.msra.mxu0 0.0
    %1254 = vmatpush.msra.mxu0 0.0
    %1255 = vmatpush.msra.mxu0 0.0
    %1256 = vmatpush.msra.mxu0 0.0
    %1257 = vmatpush.msra.mxu0 0.0
    %1258 = vmatpush.msra.mxu0 0.0
    %1259 = vmatpush.msra.mxu0 0.0
    %1260 = vmatpush.msra.mxu0 0.0
    %1261 = vmatpush.msra.mxu0 0.0
    %1262 = vmatpush.msra.mxu0 0.0
    %1263 = vmatpush.msra.mxu0 %v364
    %1264 = vmatpush.msra.mxu0 %v363
    %1265 = vmatpush.msra.mxu0 %v362
    %1266 = vmatpush.msra.mxu0 %v361
    %1267 = vmatmul.f32.gmra.mxu0 %v1162
    %v1268 = vpop.f32.mrf.mxu0
    %v1269 = vadd.f32 %v1249, %v1268
    %1270 = vdwg.mxu0
    %1271 = vmatpush.msra.mxu0 0.0
    %1272 = vmatpush.msra.mxu0 0.0
    %1273 = vmatpush.msra.mxu0 0.0
    %1274 = vmatpush.msra.mxu0 0.0
    %1275 = vmatpush.msra.mxu0 0.0
    %1276 = vmatpush.msra.mxu0 0.0
    %1277 = vmatpush.msra.mxu0 0.0
    %1278 = vmatpush.msra.mxu0 0.0
    %1279 = vmatpush.msra.mxu0 0.0
    %1280 = vmatpush.msra.mxu0 0.0
    %1281 = vmatpush.msra.mxu0 0.0
    %1282 = vmatpush.msra.mxu0 0.0
    %1283 = vmatpush.msra.mxu0 %v372
    %1284 = vmatpush.msra.mxu0 %v371
    %1285 = vmatpush.msra.mxu0 %v370
    %1286 = vmatpush.msra.mxu0 %v369
    %1287 = vmatmul.f32.gmra.mxu0 %v1185
    %v1288 = vpop.f32.mrf.mxu0
    %v1289 = vadd.f32 %v1250, %v1288
    %1290 = vdwg.mxu0
    %v1292 = vsel %vm617, %v1182, 0
    %v1295 = vsel %vm617, %v1227, 0
    %1297 = vmatpush.xpose.msra.mxu0 0.0
    %1298 = vmatpush.xpose.msra.mxu0 0.0
    %1299 = vmatpush.xpose.msra.mxu0 0.0
    %1300 = vmatpush.xpose.msra.mxu0 0.0
    %1301 = vmatpush.xpose.msra.mxu0 0.0
    %1302 = vmatpush.xpose.msra.mxu0 0.0
    %1303 = vmatpush.xpose.msra.mxu0 0.0
    %1304 = vmatpush.xpose.msra.mxu0 0.0
    %1305 = vmatpush.xpose.msra.mxu0 0.0
    %1306 = vmatpush.xpose.msra.mxu0 0.0
    %1307 = vmatpush.xpose.msra.mxu0 0.0
    %1308 = vmatpush.xpose.msra.mxu0 0.0
    %1309 = vmatpush.xpose.msra.mxu0 0.0
    %1310 = vmatpush.xpose.msra.mxu0 0.0
    %1311 = vmatpush.xpose.msra.mxu0 0.0
    %1312 = vmatpush.xpose.msra.mxu0 %v1295
    %1313 = vmatmul.f32.gmra.mxu0 %v1292
    %v1314 = vpop.f32.mrf.mxu0
    %v1315 = vadd.f32 0.0, %v1314
    %1316 = vdwg.mxu0
    %v1318 = vsel %vm617, %v1205, 0
    %v1321 = vsel %vm617, %v1247, 0
    %1323 = vmatpush.xpose.msra.mxu0 0.0
    %1324 = vmatpush.xpose.msra.mxu0 0.0
    %1325 = vmatpush.xpose.msra.mxu0 0.0
    %1326 = vmatpush.xpose.msra.mxu0 0.0
    %1327 = vmatpush.xpose.msra.mxu0 0.0
    %1328 = vmatpush.xpose.msra.mxu0 0.0
    %1329 = vmatpush.xpose.msra.mxu0 0.0
    %1330 = vmatpush.xpose.msra.mxu0 0.0
    %1331 = vmatpush.xpose.msra.mxu0 0.0
    %1332 = vmatpush.xpose.msra.mxu0 0.0
    %1333 = vmatpush.xpose.msra.mxu0 0.0
    %1334 = vmatpush.xpose.msra.mxu0 0.0
    %1335 = vmatpush.xpose.msra.mxu0 0.0
    %1336 = vmatpush.xpose.msra.mxu0 0.0
    %1337 = vmatpush.xpose.msra.mxu0 0.0
    %1338 = vmatpush.xpose.msra.mxu0 %v1321
    %1339 = vmatmul.f32.gmra.mxu0 %v1318
    %v1340 = vpop.f32.mrf.mxu0
    %v1341 = vadd.f32 0.0, %v1340
    %1342 = vdwg.mxu0
    %v1343 = vmul.f32 %v1315, 0.25
    %v1344 = vmul.f32 %v1341, 0.25
    %v1345 = vadd.f32 %v1343, %v674
    %v1346 = vadd.f32 %v1344, %v675
    %v1347 = vsel %vm680, %v1345, -inf
    %1348 = vmax.xlane.f32.xlu0 %v1347
    %v1349 = vpop.xlane.xlu0 %1348
    %v1350 = vsel %vm680, %v1346, -inf
    %1351 = vmax.xlane.f32.xlu0 %v1350
    %v1352 = vpop.xlane.xlu0 %1351
    %v1353 = vsub.f32 %v1345, %v1349
    %v1354 = vsub.f32 %v1346, %v1352
    %v1355 = vmul.f32 %v1353, 1.442695
    %v1356 = vpow.pop %v1355
    %v1357 = vmul.f32 %v1354, 1.442695
    %v1358 = vpow.pop %v1357
    %v1359 = vsel %vm680, %v1356, 0.0
    %1360 = vadd.xlane.f32.xlu0 %v1359
    %v1361 = vpop.xlane.xlu0 %1360
    %v1362 = vsel %vm680, %v1358, 0.0
    %1363 = vadd.xlane.f32.xlu0 %v1362
    %v1364 = vpop.xlane.xlu0 %1363
    %v1365 = vrcp.pop %v1361
    %v1366 = vrcp.pop %v1364
    %v1367 = vmul.f32 %v1356, %v1365
    %v1368 = vmul.f32 %v1358, %v1366
    %v1370 = vsel %vm680, %v1367, 0
    %1372 = vmatpush.msra.mxu0 0.0
    %1373 = vmatpush.msra.mxu0 0.0
    %1374 = vmatpush.msra.mxu0 0.0
    %1375 = vmatpush.msra.mxu0 0.0
    %1376 = vmatpush.msra.mxu0 0.0
    %1377 = vmatpush.msra.mxu0 0.0
    %1378 = vmatpush.msra.mxu0 0.0
    %1379 = vmatpush.msra.mxu0 0.0
    %1380 = vmatpush.msra.mxu0 0.0
    %1381 = vmatpush.msra.mxu0 0.0
    %1382 = vmatpush.msra.mxu0 0.0
    %1383 = vmatpush.msra.mxu0 0.0
    %1384 = vmatpush.msra.mxu0 0.0
    %1385 = vmatpush.msra.mxu0 0.0
    %1386 = vmatpush.msra.mxu0 0.0
    %1387 = vmatpush.msra.mxu0 %v1269
    %1388 = vmatmul.f32.gmra.mxu0 %v1370
    %v1389 = vpop.f32.mrf.mxu0
    %v1390 = vadd.f32 0.0, %v1389
    %1391 = vdwg.mxu0
    %v1393 = vsel %vm680, %v1368, 0
    %1395 = vmatpush.msra.mxu0 0.0
    %1396 = vmatpush.msra.mxu0 0.0
    %1397 = vmatpush.msra.mxu0 0.0
    %1398 = vmatpush.msra.mxu0 0.0
    %1399 = vmatpush.msra.mxu0 0.0
    %1400 = vmatpush.msra.mxu0 0.0
    %1401 = vmatpush.msra.mxu0 0.0
    %1402 = vmatpush.msra.mxu0 0.0
    %1403 = vmatpush.msra.mxu0 0.0
    %1404 = vmatpush.msra.mxu0 0.0
    %1405 = vmatpush.msra.mxu0 0.0
    %1406 = vmatpush.msra.mxu0 0.0
    %1407 = vmatpush.msra.mxu0 0.0
    %1408 = vmatpush.msra.mxu0 0.0
    %1409 = vmatpush.msra.mxu0 0.0
    %1410 = vmatpush.msra.mxu0 %v1289
    %1411 = vmatmul.f32.gmra.mxu0 %v1393
    %v1412 = vpop.f32.mrf.mxu0
    %v1413 = vadd.f32 0.0, %v1412
    %1414 = vdwg.mxu0
    %1415 = vrot.lane.b32.xlu0 %v1182, 112
    %v1416 = vpop.permute.xlu0 %1415
    %1417 = vrot.lane.b32.xlu0 %v1227, 112
    %v1418 = vpop.permute.xlu0 %1417
    %v1419 = vsel %vm617, %v1416, 0
    %v1421 = vsel %vm617, %v1418, 0
    %1423 = vmatpush.xpose.msra.mxu0 0.0
    %1424 = vmatpush.xpose.msra.mxu0 0.0
    %1425 = vmatpush.xpose.msra.mxu0 0.0
    %1426 = vmatpush.xpose.msra.mxu0 0.0
    %1427 = vmatpush.xpose.msra.mxu0 0.0
    %1428 = vmatpush.xpose.msra.mxu0 0.0
    %1429 = vmatpush.xpose.msra.mxu0 0.0
    %1430 = vmatpush.xpose.msra.mxu0 0.0
    %1431 = vmatpush.xpose.msra.mxu0 0.0
    %1432 = vmatpush.xpose.msra.mxu0 0.0
    %1433 = vmatpush.xpose.msra.mxu0 0.0
    %1434 = vmatpush.xpose.msra.mxu0 0.0
    %1435 = vmatpush.xpose.msra.mxu0 0.0
    %1436 = vmatpush.xpose.msra.mxu0 0.0
    %1437 = vmatpush.xpose.msra.mxu0 0.0
    %1438 = vmatpush.xpose.msra.mxu0 %v1421
    %1439 = vmatmul.f32.gmra.mxu0 %v1419
    %v1440 = vpop.f32.mrf.mxu0
    %v1441 = vadd.f32 0.0, %v1440
    %1442 = vdwg.mxu0
    %1443 = vrot.lane.b32.xlu0 %v1205, 112
    %v1444 = vpop.permute.xlu0 %1443
    %1445 = vrot.lane.b32.xlu0 %v1247, 112
    %v1446 = vpop.permute.xlu0 %1445
    %v1447 = vsel %vm617, %v1444, 0
    %v1449 = vsel %vm617, %v1446, 0
    %1451 = vmatpush.xpose.msra.mxu0 0.0
    %1452 = vmatpush.xpose.msra.mxu0 0.0
    %1453 = vmatpush.xpose.msra.mxu0 0.0
    %1454 = vmatpush.xpose.msra.mxu0 0.0
    %1455 = vmatpush.xpose.msra.mxu0 0.0
    %1456 = vmatpush.xpose.msra.mxu0 0.0
    %1457 = vmatpush.xpose.msra.mxu0 0.0
    %1458 = vmatpush.xpose.msra.mxu0 0.0
    %1459 = vmatpush.xpose.msra.mxu0 0.0
    %1460 = vmatpush.xpose.msra.mxu0 0.0
    %1461 = vmatpush.xpose.msra.mxu0 0.0
    %1462 = vmatpush.xpose.msra.mxu0 0.0
    %1463 = vmatpush.xpose.msra.mxu0 0.0
    %1464 = vmatpush.xpose.msra.mxu0 0.0
    %1465 = vmatpush.xpose.msra.mxu0 0.0
    %1466 = vmatpush.xpose.msra.mxu0 %v1449
    %1467 = vmatmul.f32.gmra.mxu0 %v1447
    %v1468 = vpop.f32.mrf.mxu0
    %v1469 = vadd.f32 0.0, %v1468
    %1470 = vdwg.mxu0
    %v1471 = vmul.f32 %v1441, 0.25
    %v1472 = vmul.f32 %v1469, 0.25
    %v1473 = vadd.f32 %v1471, %v674
    %v1474 = vadd.f32 %v1472, %v675
    %v1475 = vsel %vm680, %v1473, -inf
    %1476 = vmax.xlane.f32.xlu0 %v1475
    %v1477 = vpop.xlane.xlu0 %1476
    %v1478 = vsel %vm680, %v1474, -inf
    %1479 = vmax.xlane.f32.xlu0 %v1478
    %v1480 = vpop.xlane.xlu0 %1479
    %v1481 = vsub.f32 %v1473, %v1477
    %v1482 = vsub.f32 %v1474, %v1480
    %v1483 = vmul.f32 %v1481, 1.442695
    %v1484 = vpow.pop %v1483
    %v1485 = vmul.f32 %v1482, 1.442695
    %v1486 = vpow.pop %v1485
    %v1487 = vsel %vm680, %v1484, 0.0
    %1488 = vadd.xlane.f32.xlu0 %v1487
    %v1489 = vpop.xlane.xlu0 %1488
    %v1490 = vsel %vm680, %v1486, 0.0
    %1491 = vadd.xlane.f32.xlu0 %v1490
    %v1492 = vpop.xlane.xlu0 %1491
    %v1493 = vrcp.pop %v1489
    %v1494 = vrcp.pop %v1492
    %v1495 = vmul.f32 %v1484, %v1493
    %v1496 = vmul.f32 %v1486, %v1494
    %1498 = vrot.lane.b32.xlu0 %v1269, 112
    %v1499 = vpop.permute.xlu0 %1498
    %v1502 = vsel %vm680, %v1495, 0
    %1504 = vmatpush.msra.mxu0 0.0
    %1505 = vmatpush.msra.mxu0 0.0
    %1506 = vmatpush.msra.mxu0 0.0
    %1507 = vmatpush.msra.mxu0 0.0
    %1508 = vmatpush.msra.mxu0 0.0
    %1509 = vmatpush.msra.mxu0 0.0
    %1510 = vmatpush.msra.mxu0 0.0
    %1511 = vmatpush.msra.mxu0 0.0
    %1512 = vmatpush.msra.mxu0 0.0
    %1513 = vmatpush.msra.mxu0 0.0
    %1514 = vmatpush.msra.mxu0 0.0
    %1515 = vmatpush.msra.mxu0 0.0
    %1516 = vmatpush.msra.mxu0 0.0
    %1517 = vmatpush.msra.mxu0 0.0
    %1518 = vmatpush.msra.mxu0 0.0
    %1519 = vmatpush.msra.mxu0 %v1499
    %1520 = vmatmul.f32.gmra.mxu0 %v1502
    %v1521 = vpop.f32.mrf.mxu0
    %v1522 = vadd.f32 0.0, %v1521
    %1523 = vdwg.mxu0
    %1525 = vrot.lane.b32.xlu0 %v1289, 112
    %v1526 = vpop.permute.xlu0 %1525
    %v1529 = vsel %vm680, %v1496, 0
    %1531 = vmatpush.msra.mxu0 0.0
    %1532 = vmatpush.msra.mxu0 0.0
    %1533 = vmatpush.msra.mxu0 0.0
    %1534 = vmatpush.msra.mxu0 0.0
    %1535 = vmatpush.msra.mxu0 0.0
    %1536 = vmatpush.msra.mxu0 0.0
    %1537 = vmatpush.msra.mxu0 0.0
    %1538 = vmatpush.msra.mxu0 0.0
    %1539 = vmatpush.msra.mxu0 0.0
    %1540 = vmatpush.msra.mxu0 0.0
    %1541 = vmatpush.msra.mxu0 0.0
    %1542 = vmatpush.msra.mxu0 0.0
    %1543 = vmatpush.msra.mxu0 0.0
    %1544 = vmatpush.msra.mxu0 0.0
    %1545 = vmatpush.msra.mxu0 0.0
    %1546 = vmatpush.msra.mxu0 %v1526
    %1547 = vmatmul.f32.gmra.mxu0 %v1529
    %v1548 = vpop.f32.mrf.mxu0
    %v1549 = vadd.f32 0.0, %v1548
    %1550 = vdwg.mxu0
    %1553 = vrot.lane.b32.xlu0 %v1522, 16
    %v1554 = vpop.permute.xlu0 %1553
    %1555 = vrot.lane.b32.xlu0 %v1549, 16
    %v1556 = vpop.permute.xlu0 %1555
    %v1559 = vsel %vm617, %v1390, %v1554
    %v1560 = vsel %vm617, %v1413, %v1556
    %v1561 = vperm.slane %v391, 1
    %v1562 = vperm.slane %v392, 1
    %v1564 = vsel %vm257, %v1559, 0
    %1566 = vmatpush.msra.mxu0 0.0
    %1567 = vmatpush.msra.mxu0 0.0
    %1568 = vmatpush.msra.mxu0 0.0
    %1569 = vmatpush.msra.mxu0 0.0
    %1570 = vmatpush.msra.mxu0 0.0
    %1571 = vmatpush.msra.mxu0 0.0
    %1572 = vmatpush.msra.mxu0 0.0
    %1573 = vmatpush.msra.mxu0 0.0
    %1574 = vmatpush.msra.mxu0 0.0
    %1575 = vmatpush.msra.mxu0 0.0
    %1576 = vmatpush.msra.mxu0 0.0
    %1577 = vmatpush.msra.mxu0 0.0
    %1578 = vmatpush.msra.mxu0 %v382
    %1579 = vmatpush.msra.mxu0 %v381
    %1580 = vmatpush.msra.mxu0 %v380
    %1581 = vmatpush.msra.mxu0 %v379
    %1582 = vmatmul.f32.gmra.mxu0 %v1564
    %v1583 = vpop.f32.mrf.mxu0
    %v1584 = vadd.f32 %v1561, %v1583
    %1585 = vdwg.mxu0
    %v1587 = vsel %vm257, %v1560, 0
    %1589 = vmatpush.msra.mxu0 0.0
    %1590 = vmatpush.msra.mxu0 0.0
    %1591 = vmatpush.msra.mxu0 0.0
    %1592 = vmatpush.msra.mxu0 0.0
    %1593 = vmatpush.msra.mxu0 0.0
    %1594 = vmatpush.msra.mxu0 0.0
    %1595 = vmatpush.msra.mxu0 0.0
    %1596 = vmatpush.msra.mxu0 0.0
    %1597 = vmatpush.msra.mxu0 0.0
    %1598 = vmatpush.msra.mxu0 0.0
    %1599 = vmatpush.msra.mxu0 0.0
    %1600 = vmatpush.msra.mxu0 0.0
    %1601 = vmatpush.msra.mxu0 %v390
    %1602 = vmatpush.msra.mxu0 %v389
    %1603 = vmatpush.msra.mxu0 %v388
    %1604 = vmatpush.msra.mxu0 %v387
    %1605 = vmatmul.f32.gmra.mxu0 %v1587
    %v1606 = vpop.f32.mrf.mxu0
    %v1607 = vadd.f32 %v1562, %v1606
    %1608 = vdwg.mxu0
    %v1609 = vadd.f32 %v1584, %v1157
    %v1610 = vadd.f32 %v1607, %v1158
    %v1611 = vsel %vm257, %v1609, 0.0
    %1612 = vadd.xlane.f32.xlu0 %v1611
    %v1613 = vpop.xlane.xlu0 %1612
    %v1614 = vsel %vm257, %v1610, 0.0
    %1615 = vadd.xlane.f32.xlu0 %v1614
    %v1616 = vpop.xlane.xlu0 %1615
    %v1617 = vmul.f32 %v1613, %v270
    %v1618 = vmul.f32 %v1616, %v270
    %v1619 = vsub.f32 %v1609, %v1617
    %v1620 = vsub.f32 %v1610, %v1618
    %v1621 = vmul.f32 %v1619, %v1619
    %v1622 = vmul.f32 %v1620, %v1620
    %v1623 = vsel %vm257, %v1621, 0.0
    %1624 = vadd.xlane.f32.xlu0 %v1623
    %v1625 = vpop.xlane.xlu0 %1624
    %v1626 = vsel %vm257, %v1622, 0.0
    %1627 = vadd.xlane.f32.xlu0 %v1626
    %v1628 = vpop.xlane.xlu0 %1627
    %v1629 = vmul.f32 %v1625, %v270
    %v1630 = vmul.f32 %v1628, %v270
    %v1631 = vadd.f32 %v1629, 1e-12
    %v1632 = vadd.f32 %v1630, 1e-12
    %v1633 = vrsqrt.pop %v1631
    %v1634 = vmul.f32 %v1633, %v1631
    %v1635 = vmul.f32 %v1634, %v1633
    %v1636 = vmul.f32 0.5, %v1635
    %v1637 = vsub.f32 1.5, %v1636
    %v1638 = vmul.f32 %v1633, %v1637
    %vm1639 = vweird.f32 %v1631
    %vm1640 = vweird.f32 %v1633
    %vm1641 = vmor %vm1639, %vm1640
    %v1642 = vsel %vm1641, %v1633, %v1638
    %v1643 = vrsqrt.pop %v1632
    %v1644 = vmul.f32 %v1643, %v1632
    %v1645 = vmul.f32 %v1644, %v1643
    %v1646 = vmul.f32 0.5, %v1645
    %v1647 = vsub.f32 1.5, %v1646
    %v1648 = vmul.f32 %v1643, %v1647
    %vm1649 = vweird.f32 %v1632
    %vm1650 = vweird.f32 %v1643
    %vm1651 = vmor %vm1649, %vm1650
    %v1652 = vsel %vm1651, %v1643, %v1648
    %v1653 = vmul.f32 %v1619, %v1642
    %v1654 = vmul.f32 %v1620, %v1652
    %v1655 = vperm.slane %v393, 1
    %v1656 = vperm.slane %v394, 1
    %v1657 = vmul.f32 %v1653, %v1655
    %v1658 = vmul.f32 %v1654, %v1656
    %v1659 = vperm.slane %v395, 1
    %v1660 = vperm.slane %v396, 1
    %v1661 = vadd.f32 %v1657, %v1659
    %v1662 = vadd.f32 %v1658, %v1660
    %v1663 = vperm.slane %v413, 1
    %v1664 = vperm.slane %v414, 1
    %v1666 = vsel %vm257, %v1661, 0
    %1668 = vmatpush.msra.mxu0 0.0
    %1669 = vmatpush.msra.mxu0 0.0
    %1670 = vmatpush.msra.mxu0 0.0
    %1671 = vmatpush.msra.mxu0 0.0
    %1672 = vmatpush.msra.mxu0 0.0
    %1673 = vmatpush.msra.mxu0 0.0
    %1674 = vmatpush.msra.mxu0 0.0
    %1675 = vmatpush.msra.mxu0 0.0
    %1676 = vmatpush.msra.mxu0 0.0
    %1677 = vmatpush.msra.mxu0 0.0
    %1678 = vmatpush.msra.mxu0 0.0
    %1679 = vmatpush.msra.mxu0 0.0
    %1680 = vmatpush.msra.mxu0 %v404
    %1681 = vmatpush.msra.mxu0 %v403
    %1682 = vmatpush.msra.mxu0 %v402
    %1683 = vmatpush.msra.mxu0 %v401
    %1684 = vmatmul.f32.gmra.mxu0 %v1666
    %v1685 = vpop.f32.mrf.mxu0
    %v1686 = vadd.f32 %v1663, %v1685
    %1687 = vdwg.mxu0
    %v1689 = vsel %vm257, %v1662, 0
    %1691 = vmatpush.msra.mxu0 0.0
    %1692 = vmatpush.msra.mxu0 0.0
    %1693 = vmatpush.msra.mxu0 0.0
    %1694 = vmatpush.msra.mxu0 0.0
    %1695 = vmatpush.msra.mxu0 0.0
    %1696 = vmatpush.msra.mxu0 0.0
    %1697 = vmatpush.msra.mxu0 0.0
    %1698 = vmatpush.msra.mxu0 0.0
    %1699 = vmatpush.msra.mxu0 0.0
    %1700 = vmatpush.msra.mxu0 0.0
    %1701 = vmatpush.msra.mxu0 0.0
    %1702 = vmatpush.msra.mxu0 0.0
    %1703 = vmatpush.msra.mxu0 %v412
    %1704 = vmatpush.msra.mxu0 %v411
    %1705 = vmatpush.msra.mxu0 %v410
    %1706 = vmatpush.msra.mxu0 %v409
    %1707 = vmatmul.f32.gmra.mxu0 %v1689
    %v1708 = vpop.f32.mrf.mxu0
    %v1709 = vadd.f32 %v1664, %v1708
    %1710 = vdwg.mxu0
    %v1711 = vmul.f32 %v1686, %v1686
    %v1712 = vmul.f32 %v1709, %v1709
    %v1713 = vmul.f32 %v1686, %v1711
    %v1714 = vmul.f32 %v1709, %v1712
    %v1715 = vmul.f32 %v1713, 0.044715
    %v1716 = vmul.f32 %v1714, 0.044715
    %v1717 = vadd.f32 %v1686, %v1715
    %v1718 = vadd.f32 %v1709, %v1716
    %v1719 = vmul.f32 %v1717, 0.7978846
    %v1720 = vmul.f32 %v1718, 0.7978846
    %v1721 = vtanh.pop %v1719
    %v1722 = vtanh.pop %v1720
    %v1723 = vadd.f32 %v1721, 1.0
    %v1724 = vadd.f32 %v1722, 1.0
    %v1725 = vmul.f32 %v1723, 0.5
    %v1726 = vmul.f32 %v1724, 0.5
    %v1727 = vmul.f32 %v1686, %v1725
    %v1728 = vmul.f32 %v1709, %v1726
    %v1729 = vperm.slane %v479, 1
    %v1730 = vperm.slane %v480, 1
    %1731 = vmatpush.msra.mxu0 %v446
    %1732 = vmatpush.msra.mxu0 %v445
    %1733 = vmatpush.msra.mxu0 %v444
    %1734 = vmatpush.msra.mxu0 %v443
    %1735 = vmatpush.msra.mxu0 %v442
    %1736 = vmatpush.msra.mxu0 %v441
    %1737 = vmatpush.msra.mxu0 %v440
    %1738 = vmatpush.msra.mxu0 %v439
    %1739 = vmatpush.msra.mxu0 %v438
    %1740 = vmatpush.msra.mxu0 %v437
    %1741 = vmatpush.msra.mxu0 %v436
    %1742 = vmatpush.msra.mxu0 %v435
    %1743 = vmatpush.msra.mxu0 %v434
    %1744 = vmatpush.msra.mxu0 %v433
    %1745 = vmatpush.msra.mxu0 %v432
    %1746 = vmatpush.msra.mxu0 %v431
    %1747 = vmatmul.f32.gmra.mxu0 %v1727
    %v1748 = vpop.f32.mrf.mxu0
    %v1749 = vadd.f32 %v1729, %v1748
    %1750 = vdwg.mxu0
    %1751 = vmatpush.msra.mxu0 %v478
    %1752 = vmatpush.msra.mxu0 %v477
    %1753 = vmatpush.msra.mxu0 %v476
    %1754 = vmatpush.msra.mxu0 %v475
    %1755 = vmatpush.msra.mxu0 %v474
    %1756 = vmatpush.msra.mxu0 %v473
    %1757 = vmatpush.msra.mxu0 %v472
    %1758 = vmatpush.msra.mxu0 %v471
    %1759 = vmatpush.msra.mxu0 %v470
    %1760 = vmatpush.msra.mxu0 %v469
    %1761 = vmatpush.msra.mxu0 %v468
    %1762 = vmatpush.msra.mxu0 %v467
    %1763 = vmatpush.msra.mxu0 %v466
    %1764 = vmatpush.msra.mxu0 %v465
    %1765 = vmatpush.msra.mxu0 %v464
    %1766 = vmatpush.msra.mxu0 %v463
    %1767 = vmatmul.f32.gmra.mxu0 %v1728
    %v1768 = vpop.f32.mrf.mxu0
    %v1769 = vadd.f32 %v1730, %v1768
    %1770 = vdwg.mxu0
    %v1771 = vadd.f32 %v1749, %v1661
    %v1772 = vadd.f32 %v1769, %v1662
    %v1773 = vsel %vm257, %v1771, 0.0
    %1774 = vadd.xlane.f32.xlu0 %v1773
    %v1775 = vpop.xlane.xlu0 %1774
    %v1776 = vsel %vm257, %v1772, 0.0
    %1777 = vadd.xlane.f32.xlu0 %v1776
    %v1778 = vpop.xlane.xlu0 %1777
    %v1779 = vmul.f32 %v1775, %v270
    %v1780 = vmul.f32 %v1778, %v270
    %v1781 = vsub.f32 %v1771, %v1779
    %v1782 = vsub.f32 %v1772, %v1780
    %v1783 = vmul.f32 %v1781, %v1781
    %v1784 = vmul.f32 %v1782, %v1782
    %v1785 = vsel %vm257, %v1783, 0.0
    %1786 = vadd.xlane.f32.xlu0 %v1785
    %v1787 = vpop.xlane.xlu0 %1786
    %v1788 = vsel %vm257, %v1784, 0.0
    %1789 = vadd.xlane.f32.xlu0 %v1788
    %v1790 = vpop.xlane.xlu0 %1789
    %v1791 = vmul.f32 %v1787, %v270
    %v1792 = vmul.f32 %v1790, %v270
    %v1793 = vadd.f32 %v1791, 1e-12
    %v1794 = vadd.f32 %v1792, 1e-12
    %v1795 = vrsqrt.pop %v1793
    %v1796 = vmul.f32 %v1795, %v1793
    %v1797 = vmul.f32 %v1796, %v1795
    %v1798 = vmul.f32 0.5, %v1797
    %v1799 = vsub.f32 1.5, %v1798
    %v1800 = vmul.f32 %v1795, %v1799
    %vm1801 = vweird.f32 %v1793
    %vm1802 = vweird.f32 %v1795
    %vm1803 = vmor %vm1801, %vm1802
    %v1804 = vsel %vm1803, %v1795, %v1800
    %v1805 = vrsqrt.pop %v1794
    %v1806 = vmul.f32 %v1805, %v1794
    %v1807 = vmul.f32 %v1806, %v1805
    %v1808 = vmul.f32 0.5, %v1807
    %v1809 = vsub.f32 1.5, %v1808
    %v1810 = vmul.f32 %v1805, %v1809
    %vm1811 = vweird.f32 %v1794
    %vm1812 = vweird.f32 %v1805
    %vm1813 = vmor %vm1811, %vm1812
    %v1814 = vsel %vm1813, %v1805, %v1810
    %v1815 = vmul.f32 %v1781, %v1804
    %v1816 = vmul.f32 %v1782, %v1814
    %v1817 = vperm.slane %v481, 1
    %v1818 = vperm.slane %v482, 1
    %v1819 = vmul.f32 %v1815, %v1817
    %v1820 = vmul.f32 %v1816, %v1818
    %v1821 = vperm.slane %v483, 1
    %v1822 = vperm.slane %v484, 1
    %v1823 = vadd.f32 %v1819, %v1821
    %v1824 = vadd.f32 %v1820, %v1822
    %v1825 = vld [vmem:[%s22] sm:$0xff]
    %v1826 = vld [vmem:[%s22 + $0x8] sm:$0xff]
    %v1827 = vld [vmem:[%s22 + $0x10] sm:$0xff]
    %v1828 = vld [vmem:[%s22 + $0x18] sm:$0xff]
    %v1829 = vld [vmem:[%s23] sm:$0x1]
    %v1831 = vperm.slane %v1829, 0
    %v1835 = vrot.slane %v1823, 7
    %v1836 = vrot.slane %v1824, 6
    %vm1837 = vcmask 1041409
    %v1838 = vsel %vm1837, %v1836, %v1835
    %v1839 = vsel %vm257, %v1838, 0
    %1841 = vmatpush.msra.mxu0 0.0
    %1842 = vmatpush.msra.mxu0 0.0
    %1843 = vmatpush.msra.mxu0 0.0
    %1844 = vmatpush.msra.mxu0 0.0
    %1845 = vmatpush.msra.mxu0 0.0
    %1846 = vmatpush.msra.mxu0 0.0
    %1847 = vmatpush.msra.mxu0 0.0
    %1848 = vmatpush.msra.mxu0 0.0
    %1849 = vmatpush.msra.mxu0 0.0
    %1850 = vmatpush.msra.mxu0 0.0
    %1851 = vmatpush.msra.mxu0 0.0
    %1852 = vmatpush.msra.mxu0 0.0
    %1853 = vmatpush.msra.mxu0 %v1828
    %1854 = vmatpush.msra.mxu0 %v1827
    %1855 = vmatpush.msra.mxu0 %v1826
    %1856 = vmatpush.msra.mxu0 %v1825
    %1857 = vmatmul.f32.gmra.mxu0 %v1839
    %v1858 = vpop.f32.mrf.mxu0
    %v1859 = vadd.f32 %v1831, %v1858
    %1860 = vdwg.mxu0
    %v1861 = vmul.f32 %v1859, %v246
    %v1862 = vxor.u32 %v1861, 2147483648
    %v1863 = vmul.f32 %v1862, 1.442695
    %v1864 = vpow.pop %v1863
    %v1865 = vadd.f32 %v1864, 1.0
    %v1866 = vrcp.pop %v1865
    %v1867 = vmul.f32 %v1865, %v1866
    %v1868 = vsub.f32 1.0, %v1867
    %v1869 = vmul.f32 %v1866, %v1868
    %v1870 = vadd.f32 %v1866, %v1869
    %vm1871 = vweird.f32 %v1865
    %vm1872 = vweird.f32 %v1866
    %vm1873 = vmor %vm1871, %vm1872
    %v1874 = vsel %vm1873, %v1866, %v1870
    %v1875 = vand.u32 2147483647, %v1865
    %vm1876 = vcmp.eq.f32.partialorder %v1875, 8.507059e+37
    %v1877 = vand.u32 %v1865, 2147483648
    %v1878 = vor.u32 1.1754944e-38, %v1877
    %v1879 = vsel %vm1876, %v1878, %v1874
    %v1880 = vmul.f32 1.0, %v1879
    %v1882 = vrot.slane %v246, 2
    %v1884 = vmul.f32 %v1859, %v1882
    %v1885 = vxor.u32 %v1884, 2147483648
    %v1886 = vmul.f32 %v1885, 1.442695
    %v1887 = vpow.pop %v1886
    %v1888 = vadd.f32 %v1887, 1.0
    %v1889 = vrcp.pop %v1888
    %v1890 = vmul.f32 %v1888, %v1889
    %v1891 = vsub.f32 1.0, %v1890
    %v1892 = vmul.f32 %v1889, %v1891
    %v1893 = vadd.f32 %v1889, %v1892
    %vm1894 = vweird.f32 %v1888
    %vm1895 = vweird.f32 %v1889
    %vm1896 = vmor %vm1894, %vm1895
    %v1897 = vsel %vm1896, %v1889, %v1893
    %v1898 = vand.u32 2147483647, %v1888
    %vm1899 = vcmp.eq.f32.partialorder %v1898, 8.507059e+37
    %v1900 = vand.u32 %v1888, 2147483648
    %v1901 = vor.u32 1.1754944e-38, %v1900
    %v1902 = vsel %vm1899, %v1901, %v1897
    %v1903 = vmul.f32 1.0, %v1902
    %v1904 = vsub.f32 %v1880, %v1903
    %v1905 = vsub.f32 0.0, %v1904
    %v1906 = vmul.f32 %v1905, 1.442695
    %v1907 = vpow.pop %v1906
    %v1908 = vadd.f32 %v1907, 1.0
    %v1909 = vlog2.pop %v1908
    %v1910 = vmul.f32 %v1909, 0.6931472
    %vm1911 = vcmask 254976
    %v1912 = vsel %vm1911, %v1910, 0.0
    %1913 = vadd.xlane.f32.xlu0 %v1912
    %v1914 = vpop.xlane.xlu0 %1913
    %v1915 = vrot.slane %v1914, 4
    %v1916 = vadd.f32 %v1914, %v1915
    %v1917 = vrot.slane %v1916, 2
    %v1918 = vadd.f32 %v1916, %v1917
    %v1919 = vrot.slane %v1918, 1
    %v1920 = vadd.f32 %v1918, %v1919
    %s1921 = vtos %v1920
    %v1922 = vrcp.pop 64.0
    %v1923 = vmul.f32 64.0, %v1922
    %v1924 = vsub.f32 1.0, %v1923
    %v1925 = vmul.f32 %v1922, %v1924
    %v1926 = vadd.f32 %v1922, %v1925
    %vm1927 = vweird.f32 %v1922
    %v1928 = vsel %vm1927, %v1922, %v1926
    %s1929 = vtos %v1928
    %s1930 = smul.f32 %s1921, %s1929
    %s1931 = scalar_lea.smem [#allocation2], 0
    %1932 = sst [smem:[%s1931]] %s1930
    // Predicated region
    $region98: #{model_gen_forward.1} parent=1 // pred_check
      _
    $region99: #{model_gen_forward.1} parent=1 // pred_check_branch
      %1934 = sbr.rel (0) target = $region101
    $region100: #{model_gen_forward.1} parent=1 // pred_region
      %1936 = vsyncadd [#allocation3], 0
      %s1938 = sshll.u32 %s24, 4
      %s1939 = int_to_ptr.hbm [resolvable:$true] %s1938
      %1941 = dma.smem_to_hbm [#allocation2], 16, %s1939, [#allocation3]
    $region101: #{model_gen_forward.1} parent=1 // pred_fallthru
      _
    // Predicated region
    $region102: #{model_gen_forward.1} parent=1 // pred_check
      _
    $region103: #{model_gen_forward.1} parent=1 // pred_check_branch
      %1943 = sbr.rel (0) target = $region105
    $region104: #{model_gen_forward.1} parent=1 // pred_region
      %1945 = dma.done [#allocation3], 16
    $region105: #{model_gen_forward.1} parent=1 // pred_fallthru
      _
    %1946 = sfence
    %1947 = vsyncpa [#allocation3], 1

</llo_original>
